<compile_context>
chip_gen: v7x
topology: tpu7x:2x2x1
jax: 0.10.0
libtpu: 0.0.40
codegen_flags: <defaults>
</compile_context>

<pallas_src>
import jax
import jax.numpy as jnp
from jax.experimental import pallas as pl
from jax.experimental.pallas import tpu as pltpu

IN_FEATURES = 2
IN_PADDED = 8                 # fc1 contraction dim zero-padded 2 -> 8 (MXU)
HIDDEN = 512
OUT_FEATURES = 28 * 28        # 784 = 6*128 + 16 -> mostly unmasked lane stores
ROW_ALIGN = 16                # bf16 sublane packing: keep batch tiles 16-aligned


def _round_up(n, m):
    return ((n + m - 1) // m) * m


def _device_kind():
    try:
        return jax.devices()[0].device_kind.lower()
    except Exception:  # pragma: no cover - CPU / interpret fallback
        return ""


def _default_tile_b():
    kind = _device_kind()
    if any(v in kind for v in ("v2", "v3", "v4", "v5")):
        return 512            # v5e: smaller scoped-VMEM default, 4x128 MXU
    return 1024               # v6e / v7x: amortize ~0.35us per-step overhead


def _tensorcores_per_chip():
    kind = _device_kind()
    return 2 if ("v7" in kind or "tpu7" in kind) else 1


def _choose_tiling(batch, tile_b):
    """Pick (num_tiles, tile_rows, padded_batch) with minimal over-padding."""
    n = max(1, -(-batch // tile_b))
    # v7x: "parallel" grid sharding only helps with >= 2 (ideally even) steps.
    if _tensorcores_per_chip() >= 2 and batch >= 512 and n % 2:
        n += 1
    tb = _round_up(-(-batch // n), ROW_ALIGN)
    return n, tb, n * tb


def _generator_kernel(x_ref, w1_ref, b1_ref, w2_ref, b2_ref, w3_ref, b3_ref,
                      o_ref):
    # fc1: tiny K=8 (zero-padded) f32 MXU matmul; bias + ReLU on the VPU.
    h1 = jnp.dot(x_ref[...], w1_ref[...], preferred_element_type=jnp.float32)
    h1 = jnp.maximum(h1 + b1_ref[...], 0.0)          # (TB, 512) f32

    # fc2: bf16 MXU matmul, f32 accumulation; bias + ReLU in f32.
    h2 = jnp.dot(h1.astype(jnp.bfloat16), w2_ref[...],
                 preferred_element_type=jnp.float32)
    h2 = jnp.maximum(h2 + b2_ref[...], 0.0)           # (TB, 512) f32

    # fc3: bf16 MXU matmul, f32 accumulation; bias add in f32.
    logits = jnp.dot(h2.astype(jnp.bfloat16), w3_ref[...],
                     preferred_element_type=jnp.float32)
    logits = logits + b3_ref[...]                     # (TB, 784) f32

    # sigmoid(x) = 1 / (1 + exp(-x)); exp + approx reciprocal both on the EUP.
    # bf16 store halves the output HBM writeback (the dominant HBM stream).
    o_ref[...] = pl.reciprocal(1.0 + jnp.exp(-logits),
                               approx=True).astype(o_ref.dtype)


def generator_forward(x, params, *, tile_b=None, out_dtype=jnp.bfloat16,
                      flatten=False):
    """x: (B, 2) f32 -> (B, 28, 28) (bf16 by default).

    flatten=True returns the (B, 784) kernel output directly (no 28x28
    relayout) for consumers that can take the flat form.
    """
    w1, b1, w2, b2, w3, b3 = params
    B = x.shape[0]
    if tile_b is None:
        tile_b = _default_tile_b()

    n_tiles, tb, b_pad = _choose_tiling(B, tile_b)

    # Zero-pad: batch -> b_pad rows, features 2 -> 8 (w1 rows 2..7 are zero).
    x_pad = jnp.pad(x, ((0, b_pad - B), (0, IN_PADDED - x.shape[1])))

    def resident(shape):
        # Constant block index -> DMA'd once, VMEM-resident across the grid.
        return pl.BlockSpec(shape, lambda i: (0, 0))

    out_bytes = jnp.dtype(out_dtype).itemsize
    weight_bytes = (w1.size * 4 + b1.size * 4 + w2.size * 2 + b2.size * 4 +
                    w3.size * 2 + b3.size * 4)
    cost = pl.CostEstimate(
        flops=2 * b_pad * (IN_PADDED * HIDDEN
                           + HIDDEN * HIDDEN
                           + HIDDEN * OUT_FEATURES),
        transcendentals=b_pad * OUT_FEATURES,
        bytes_accessed=weight_bytes
        + b_pad * (IN_PADDED * 4 + OUT_FEATURES * out_bytes),
    )

    out_flat = pl.pallas_call(
        _generator_kernel,
        out_shape=jax.ShapeDtypeStruct((b_pad, OUT_FEATURES), out_dtype),
        grid=(n_tiles,),
        in_specs=[
            pl.BlockSpec((tb, IN_PADDED), lambda i: (i, 0)),   # x tile
            resident((IN_PADDED, HIDDEN)),                     # w1 (f32)
            resident((1, HIDDEN)),                             # b1 (f32)
            resident((HIDDEN, HIDDEN)),                        # w2 (bf16)
            resident((1, HIDDEN)),                             # b2 (f32)
            resident((HIDDEN, OUT_FEATURES)),                  # w3 (bf16)
            resident((1, OUT_FEATURES)),                       # b3 (f32)
        ],
        out_specs=pl.BlockSpec((tb, OUT_FEATURES), lambda i: (i, 0)),
        compiler_params=pltpu.CompilerParams(
            dimension_semantics=("parallel",),
            vmem_limit_bytes=48 * 1024 * 1024),
        cost_estimate=cost,
    )(x_pad, w1, b1, w2, b2, w3, b3)

    out = out_flat if b_pad == B else out_flat[:B]
    if flatten:
        return out
    # The 784 -> 28x28 view is never layout-free on TPU; prefer flatten=True
    # and fuse the reshape into the consumer when possible.
    return out.reshape(-1, 28, 28)


def init_params(key):
    """Deterministic init mirroring nn.Linear's U(-1/sqrt(fan_in), ...).

    Weights stored as (in, out). fc2/fc3 weights are kept in bf16 for the MXU
    (the kernel accumulates in f32); fc1 weight and all biases stay f32.
    fc1 weight is zero-padded (2, 512) -> (8, 512) so fc1 runs on the MXU.
    """
    keys = jax.random.split(key, 6)

    def linear(kw, kb, fan_in, fan_out):
        bound = 1.0 / (float(fan_in) ** 0.5)
        w = jax.random.uniform(kw, (fan_in, fan_out), jnp.float32, -bound, bound)
        b = jax.random.uniform(kb, (1, fan_out), jnp.float32, -bound, bound)
        return w, b

    w1, b1 = linear(keys[0], keys[1], IN_FEATURES, HIDDEN)
    w2, b2 = linear(keys[2], keys[3], HIDDEN, HIDDEN)
    w3, b3 = linear(keys[4], keys[5], HIDDEN, OUT_FEATURES)

    w1 = jnp.pad(w1, ((0, IN_PADDED - IN_FEATURES), (0, 0)))

    return (w1, b1,
            w2.astype(jnp.bfloat16), b2,
            w3.astype(jnp.bfloat16), b3)


def generator_reference(x, params):
    """Pure-JAX reference using the same matmul numerics (bf16 dots, f32 acc)."""
    w1, b1, w2, b2, w3, b3 = params
    h1 = jax.nn.relu(
        jnp.dot(x, w1[:IN_FEATURES], preferred_element_type=jnp.float32) + b1)
    h2 = jax.nn.relu(
        jnp.dot(h1.astype(jnp.bfloat16), w2,
                preferred_element_type=jnp.float32) + b2)
    logits = jnp.dot(h2.astype(jnp.bfloat16), w3,
                     preferred_element_type=jnp.float32) + b3
    return jax.nn.sigmoid(logits).reshape(-1, 28, 28)


if __name__ == "__main__":
    key = jax.random.PRNGKey(0)
    k_params, k_x = jax.random.split(key)

    params = init_params(k_params)
    batch = 8
    x = jax.random.normal(k_x, (batch, IN_FEATURES), jnp.float32)

    out = jax.block_until_ready(generator_forward(x, params))
    ref = jax.block_until_ready(generator_reference(x, params))

    assert out.shape == (batch, 28, 28), out.shape
    # Tolerance covers the EUP approx-reciprocal in the in-kernel sigmoid plus
    # the bf16 output quantization (matmul numerics are identical on both
    # sides: bf16 inputs, f32 accumulate).
    err = float(jnp.max(jnp.abs(out.astype(jnp.float32) - ref)))
    assert err < 1e-2, err

    print("KERNEL_OK")
</pallas_src>

<mosaic_0001>
module attributes {stable_mosaic.version = 11 : i64} {
  func.func @_generator_kernel(%arg0: i32, %arg1: memref<16x8xf32, #tpu.memory_space<vmem>>, %arg2: memref<8x512xf32, #tpu.memory_space<vmem>>, %arg3: memref<1x512xf32, #tpu.memory_space<vmem>>, %arg4: memref<512x512xbf16, #tpu.memory_space<vmem>>, %arg5: memref<1x512xf32, #tpu.memory_space<vmem>>, %arg6: memref<512x784xbf16, #tpu.memory_space<vmem>>, %arg7: memref<1x784xf32, #tpu.memory_space<vmem>>, %arg8: memref<16x784xbf16, #tpu.memory_space<vmem>>) attributes {dimension_semantics = [#tpu.dimension_semantics<parallel>], iteration_bounds = array<i64: 1>, scalar_prefetch = 0 : i64, scratch_operands = 0 : i64, tpu.core_type = #tpu.core_type<tc>, window_params = [{transform_indices = @transform_0, window_bounds = array<i64: 16, 8>}, {pipeline_mode = #tpu.pipeline_mode<synchronous>, transform_indices = @transform_1, window_bounds = array<i64: 8, 512>}, {pipeline_mode = #tpu.pipeline_mode<synchronous>, transform_indices = @transform_2, window_bounds = array<i64: 1, 512>}, {pipeline_mode = #tpu.pipeline_mode<synchronous>, transform_indices = @transform_3, window_bounds = array<i64: 512, 512>}, {pipeline_mode = #tpu.pipeline_mode<synchronous>, transform_indices = @transform_4, window_bounds = array<i64: 1, 512>}, {pipeline_mode = #tpu.pipeline_mode<synchronous>, transform_indices = @transform_5, window_bounds = array<i64: 512, 784>}, {pipeline_mode = #tpu.pipeline_mode<synchronous>, transform_indices = @transform_6, window_bounds = array<i64: 1, 784>}, {transform_indices = @transform_7, window_bounds = array<i64: 16, 784>}]} {
    %c0 = arith.constant 0 : index
    %c0_0 = arith.constant 0 : index
    %0 = vector.load %arg1[%c0, %c0_0] : memref<16x8xf32, #tpu.memory_space<vmem>>, vector<16x8xf32>
    %c0_1 = arith.constant 0 : index
    %c0_2 = arith.constant 0 : index
    %1 = vector.load %arg2[%c0_1, %c0_2] : memref<8x512xf32, #tpu.memory_space<vmem>>, vector<8x512xf32>
    %cst = arith.constant dense<0.000000e+00> : vector<16x512xf32>
    %2 = tpu.matmul %0, %1, %cst {dimension_numbers = #tpu.dot_dimension_numbers<[1], [0], [0], [1], [0, 0, 1, 1], [], []>} : vector<16x8xf32>, vector<8x512xf32>, vector<16x512xf32> -> vector<16x512xf32>
    %c0_3 = arith.constant 0 : index
    %c0_4 = arith.constant 0 : index
    %3 = vector.load %arg3[%c0_3, %c0_4] : memref<1x512xf32, #tpu.memory_space<vmem>>, vector<1x512xf32>
    %4 = vector.broadcast %3 : vector<1x512xf32> to vector<16x512xf32>
    %5 = arith.addf %2, %4 : vector<16x512xf32>
    %cst_5 = arith.constant 0.000000e+00 : f32
    %6 = vector.broadcast %cst_5 : f32 to vector<16x512xf32>
    %7 = arith.maximumf %5, %6 : vector<16x512xf32>
    %8 = arith.truncf %7 : vector<16x512xf32> to vector<16x512xbf16>
    %c0_6 = arith.constant 0 : index
    %c0_7 = arith.constant 0 : index
    %9 = vector.load %arg4[%c0_6, %c0_7] : memref<512x512xbf16, #tpu.memory_space<vmem>>, vector<512x512xbf16>
    %cst_8 = arith.constant dense<0.000000e+00> : vector<16x512xf32>
    %10 = tpu.matmul %8, %9, %cst_8 {dimension_numbers = #tpu.dot_dimension_numbers<[1], [0], [0], [1], [0, 0, 1, 1], [], []>} : vector<16x512xbf16>, vector<512x512xbf16>, vector<16x512xf32> -> vector<16x512xf32>
    %c0_9 = arith.constant 0 : index
    %c0_10 = arith.constant 0 : index
    %11 = vector.load %arg5[%c0_9, %c0_10] : memref<1x512xf32, #tpu.memory_space<vmem>>, vector<1x512xf32>
    %12 = vector.broadcast %11 : vector<1x512xf32> to vector<16x512xf32>
    %13 = arith.addf %10, %12 : vector<16x512xf32>
    %cst_11 = arith.constant 0.000000e+00 : f32
    %14 = vector.broadcast %cst_11 : f32 to vector<16x512xf32>
    %15 = arith.maximumf %13, %14 : vector<16x512xf32>
    %16 = arith.truncf %15 : vector<16x512xf32> to vector<16x512xbf16>
    %c0_12 = arith.constant 0 : index
    %c0_13 = arith.constant 0 : index
    %17 = vector.load %arg6[%c0_12, %c0_13] : memref<512x784xbf16, #tpu.memory_space<vmem>>, vector<512x784xbf16>
    %cst_14 = arith.constant dense<0.000000e+00> : vector<16x784xf32>
    %18 = tpu.matmul %16, %17, %cst_14 {dimension_numbers = #tpu.dot_dimension_numbers<[1], [0], [0], [1], [0, 0, 1, 1], [], []>} : vector<16x512xbf16>, vector<512x784xbf16>, vector<16x784xf32> -> vector<16x784xf32>
    %c0_15 = arith.constant 0 : index
    %c0_16 = arith.constant 0 : index
    %19 = vector.load %arg7[%c0_15, %c0_16] : memref<1x784xf32, #tpu.memory_space<vmem>>, vector<1x784xf32>
    %20 = vector.broadcast %19 : vector<1x784xf32> to vector<16x784xf32>
    %21 = arith.addf %18, %20 : vector<16x784xf32>
    %cst_17 = arith.constant 0.000000e+00 : f32
    %22 = vector.broadcast %cst_17 : f32 to vector<16x784xf32>
    %23 = arith.subf %22, %21 : vector<16x784xf32>
    %24 = math.exp %23 : vector<16x784xf32>
    %cst_18 = arith.constant 1.000000e+00 : f32
    %25 = vector.broadcast %cst_18 : f32 to vector<16x784xf32>
    %26 = arith.addf %25, %24 : vector<16x784xf32>
    %27 = tpu.reciprocal %26 {approx = true} : vector<16x784xf32> -> vector<16x784xf32>
    %28 = arith.truncf %27 : vector<16x784xf32> to vector<16x784xbf16>
    %c0_19 = arith.constant 0 : index
    %c0_20 = arith.constant 0 : index
    %29 = vector.load %arg8[%c0_19, %c0_20] : memref<16x784xbf16, #tpu.memory_space<vmem>>, vector<16x784xbf16>
    tpu.vector_store %arg8[%c0_19, %c0_20], %28 {strides = array<i32>} : memref<16x784xbf16, #tpu.memory_space<vmem>>, vector<16x784xbf16>,
    return
  }
  func.func @transform_0(%arg0: i32) -> (i32, i32) {
    %c0_i32 = arith.constant 0 : i32
    %c0_i32_0 = arith.constant 0 : i32
    return %arg0, %c0_i32 : i32, i32
  }
  func.func @transform_1(%arg0: i32) -> (i32, i32) {
    %c0_i32 = arith.constant 0 : i32
    %c0_i32_0 = arith.constant 0 : i32
    %c0_i32_1 = arith.constant 0 : i32
    return %c0_i32, %c0_i32_0 : i32, i32
  }
  func.func @transform_2(%arg0: i32) -> (i32, i32) {
    %c0_i32 = arith.constant 0 : i32
    %c0_i32_0 = arith.constant 0 : i32
    %c0_i32_1 = arith.constant 0 : i32
    return %c0_i32, %c0_i32_0 : i32, i32
  }
  func.func @transform_3(%arg0: i32) -> (i32, i32) {
    %c0_i32 = arith.constant 0 : i32
    %c0_i32_0 = arith.constant 0 : i32
    %c0_i32_1 = arith.constant 0 : i32
    return %c0_i32, %c0_i32_0 : i32, i32
  }
  func.func @transform_4(%arg0: i32) -> (i32, i32) {
    %c0_i32 = arith.constant 0 : i32
    %c0_i32_0 = arith.constant 0 : i32
    %c0_i32_1 = arith.constant 0 : i32
    return %c0_i32, %c0_i32_0 : i32, i32
  }
  func.func @transform_5(%arg0: i32) -> (i32, i32) {
    %c0_i32 = arith.constant 0 : i32
    %c0_i32_0 = arith.constant 0 : i32
    %c0_i32_1 = arith.constant 0 : i32
    return %c0_i32, %c0_i32_0 : i32, i32
  }
  func.func @transform_6(%arg0: i32) -> (i32, i32) {
    %c0_i32 = arith.constant 0 : i32
    %c0_i32_0 = arith.constant 0 : i32
    %c0_i32_1 = arith.constant 0 : i32
    return %c0_i32, %c0_i32_0 : i32, i32
  }
  func.func @transform_7(%arg0: i32) -> (i32, i32) {
    %c0_i32 = arith.constant 0 : i32
    %c0_i32_0 = arith.constant 0 : i32
    return %arg0, %c0_i32 : i32, i32
  }
}

</mosaic_0001>

<llo_original>
// kernel: tpu_custom_call.1
$region0: #{tpu_custom_call.1}
  #allocation0 [shape = 'u32[]', space=smem, size = 0x4, offset = 0x4, fixed_abs, tag = 'smem constant byte address 0x4 - core index']
  #allocation1 [shape = 'u32[144,128]{1,0:T(1,128)}', space=vmem, size = 0x12000, scoped, tag = 'internal scratch']
  %s0 = inlined_call_operand.vmem [shape: f32[16,8], index: 0, kind: input, shape index: {}]
  %s1 = inlined_call_operand.vmem [shape: f32[8,512], index: 1, kind: input, shape index: {}]
  %s2 = inlined_call_operand.vmem [shape: f32[1,512], index: 2, kind: input, shape index: {}]
  %s3 = inlined_call_operand.vmem [shape: bf16[512,512], index: 3, kind: input, shape index: {}]
  %s4 = inlined_call_operand.vmem [shape: f32[1,512], index: 4, kind: input, shape index: {}]
  %s5 = inlined_call_operand.vmem [shape: bf16[512,784], index: 5, kind: input, shape index: {}]
  %s6 = inlined_call_operand.vmem [shape: f32[1,784], index: 6, kind: input, shape index: {}]
  %s7 = inlined_call_operand.hbm [shape: bf16[16,784], index: 7, kind: output, shape index: {}]
  %s8 = sld [smem:[#allocation0]]
  $region38: #{tpu_custom_call.1} parent=0
    _
  %s10 = ssub.s32 1, %s8
  %s11 = scalar_select 0, %s10, %s8
  $region1: #{tpu_custom_call.1} parent=0
    #allocation2 [shape = 'u8[28672]{0}', space=vmem, size = 0x7000, scoped, tag = 'output window, operand 0, single buffered']
    #allocation3 [shape = 's32[1]{0}', space=sflag, size = 0x4, scoped, tag = 'scoped memory for tpu_custom_call.1']
    %12 = vsyncpa [#allocation3], 0
    // Predicated region
    $region2: #{tpu_custom_call.1} parent=1 // pred_check
      _
    $region3: #{tpu_custom_call.1} parent=1 // pred_check_branch
      %14 = sbr.rel (0) target = $region5
    $region4: #{tpu_custom_call.1} parent=1 // pred_region
      _
    $region5: #{tpu_custom_call.1} parent=1 // pred_fallthru
      _
    // Predicated region
    $region6: #{tpu_custom_call.1} parent=1 // pred_check
      _
    $region7: #{tpu_custom_call.1} parent=1 // pred_check_branch
      %16 = sbr.rel (0) target = $region9
    $region8: #{tpu_custom_call.1} parent=1 // pred_region
      _
    $region9: #{tpu_custom_call.1} parent=1 // pred_fallthru
      _
    // Predicated region
    $region10: #{tpu_custom_call.1} parent=1 // pred_check
      _
    $region11: #{tpu_custom_call.1} parent=1 // pred_check_branch
      %18 = sbr.rel (0) target = $region13
    $region12: #{tpu_custom_call.1} parent=1 // pred_region
      _
    $region13: #{tpu_custom_call.1} parent=1 // pred_fallthru
      _
    // Predicated region
    $region14: #{tpu_custom_call.1} parent=1 // pred_check
      _
    $region15: #{tpu_custom_call.1} parent=1 // pred_check_branch
      %20 = sbr.rel (0) target = $region17
    $region16: #{tpu_custom_call.1} parent=1 // pred_region
      _
    $region17: #{tpu_custom_call.1} parent=1 // pred_fallthru
      _
    // Predicated region
    $region18: #{tpu_custom_call.1} parent=1 // pred_check
      _
    $region19: #{tpu_custom_call.1} parent=1 // pred_check_branch
      %22 = sbr.rel (0) target = $region21
    $region20: #{tpu_custom_call.1} parent=1 // pred_region
      _
    $region21: #{tpu_custom_call.1} parent=1 // pred_fallthru
      _
    // Predicated region
    $region22: #{tpu_custom_call.1} parent=1 // pred_check
      _
    $region23: #{tpu_custom_call.1} parent=1 // pred_check_branch
      %24 = sbr.rel (0) target = $region25
    $region24: #{tpu_custom_call.1} parent=1 // pred_region
      _
    $region25: #{tpu_custom_call.1} parent=1 // pred_fallthru
      _
    // Predicated region
    $region26: #{tpu_custom_call.1} parent=1 // pred_check
      _
    $region27: #{tpu_custom_call.1} parent=1 // pred_check_branch
      %26 = sbr.rel (0) target = $region29
    $region28: #{tpu_custom_call.1} parent=1 // pred_region
      _
    $region29: #{tpu_custom_call.1} parent=1 // pred_fallthru
      _
    %v28 = vld [vmem:[%s0] sm:$0xff]
    %v29 = vld [vmem:[%s0 + $0x8] sm:$0xff]
    %v30 = vld [vmem:[%s1] sm:$0xff]
    %v31 = vld [vmem:[%s1 + $0x8] sm:$0xff]
    %v32 = vld [vmem:[%s1 + $0x10] sm:$0xff]
    %v33 = vld [vmem:[%s1 + $0x18] sm:$0xff]
    %v34 = vld [vmem:[%s2] sm:$0xf]
    %v36 = vlaneseq
    %v37 = vshrl.u32 %v36, 7
    %v38 = vsub.s32 0, %v37
    %v39 = vrot.slane %v34, %v38
    %v40 = vlaneseq
    %v41 = vshrl.u32 %v40, 7
    %v42 = vsub.s32 1, %v41
    %v43 = vrot.slane %v34, %v42
    %v44 = vlaneseq
    %v45 = vshrl.u32 %v44, 7
    %v46 = vsub.s32 2, %v45
    %v47 = vrot.slane %v34, %v46
    %v48 = vlaneseq
    %v49 = vshrl.u32 %v48, 7
    %v50 = vsub.s32 3, %v49
    %v51 = vrot.slane %v34, %v50
    %vm56 = vcmask 64512
    %v58 = vsel %vm56, %v28, 0
    %v61 = vsel %vm56, %v29, 0
    %63 = vmatprep.subr.mxu0 %v31
    %64 = vmatpush1.msra.mxu0 %v30
    %65 = vmatprep.subr.mxu0 0.0
    %66 = vmatpush1.msra.mxu0 0.0
    %67 = vmatprep.subr.mxu0 0.0
    %68 = vmatpush1.msra.mxu0 0.0
    %69 = vmatprep.subr.mxu0 0.0
    %70 = vmatpush1.msra.mxu0 0.0
    %71 = vmatprep.subr.mxu0 0.0
    %72 = vmatpush1.msra.mxu0 0.0
    %73 = vmatprep.subr.mxu0 0.0
    %74 = vmatpush1.msra.mxu0 0.0
    %75 = vmatprep.subr.mxu0 0.0
    %76 = vmatpush1.msra.mxu0 0.0
    %77 = vmatprep.subr.mxu0 0.0
    %78 = vmatpush1.msra.mxu0 0.0
    %79 = vmatprep.subr.mxu0 0.0
    %80 = vmatpush1.msra.mxu0 0.0
    %81 = vmatprep.subr.mxu0 0.0
    %82 = vmatpush1.msra.mxu0 0.0
    %83 = vmatprep.subr.mxu0 0.0
    %84 = vmatpush1.msra.mxu0 0.0
    %85 = vmatprep.subr.mxu0 0.0
    %86 = vmatpush1.msra.mxu0 0.0
    %87 = vmatprep.subr.mxu0 0.0
    %88 = vmatpush1.msra.mxu0 0.0
    %89 = vmatprep.subr.mxu0 0.0
    %90 = vmatpush1.msra.mxu0 0.0
    %91 = vmatprep.subr.mxu0 0.0
    %92 = vmatpush1.msra.mxu0 0.0
    %93 = vmatprep.subr.mxu0 0.0
    %94 = vmatpush1.msra.mxu0 0.0
    %95 = vmatprep.subr.mxu0 0.0
    %96 = vmatpush1.msra.mxu0 0.0
    %97 = vmatprep.subr.mxu0 0.0
    %98 = vmatpush1.msra.mxu0 0.0
    %99 = vmatprep.subr.mxu0 0.0
    %100 = vmatpush1.msra.mxu0 0.0
    %101 = vmatprep.subr.mxu0 0.0
    %102 = vmatpush1.msra.mxu0 0.0
    %103 = vmatprep.subr.mxu0 0.0
    %104 = vmatpush1.msra.mxu0 0.0
    %105 = vmatprep.subr.mxu0 0.0
    %106 = vmatpush1.msra.mxu0 0.0
    %107 = vmatprep.subr.mxu0 0.0
    %108 = vmatpush1.msra.mxu0 0.0
    %109 = vmatprep.subr.mxu0 0.0
    %110 = vmatpush1.msra.mxu0 0.0
    %111 = vmatprep.subr.mxu0 0.0
    %112 = vmatpush1.msra.mxu0 0.0
    %113 = vmatprep.subr.mxu0 0.0
    %114 = vmatpush1.msra.mxu0 0.0
    %115 = vmatprep.subr.mxu0 0.0
    %116 = vmatpush1.msra.mxu0 0.0
    %117 = vmatprep.subr.mxu0 0.0
    %118 = vmatpush1.msra.mxu0 0.0
    %119 = vmatprep.subr.mxu0 0.0
    %120 = vmatpush1.msra.mxu0 0.0
    %121 = vmatprep.subr.mxu0 0.0
    %122 = vmatpush1.msra.mxu0 0.0
    %123 = vmatprep.subr.mxu0 0.0
    %124 = vmatpush1.msra.mxu0 0.0
    %125 = vmatprep.subr.mxu0 0.0
    %126 = vmatpush1.msra.mxu0 0.0
    %127 = vmatprep.mubr.f32.mxu0 0.0
    %128 = vmatmul.mubr.f32.gmra.mrb[0].mxu0 %v58
    %v129 = vpop.f32.mrb[0].mxu0
    %v130 = vadd.f32 %v39, %v129
    %v131 = vpop.f32.mrb[0].mxu0
    %v132 = vadd.f32 %v43, %v131
    %133 = vmatprep.mubr.f32.mxu0 0.0
    %134 = vmatmul.mubr.f32.gmra.mrb[0].mxu0 %v61
    %v135 = vpop.f32.mrb[0].mxu0
    %v136 = vadd.f32 %v39, %v135
    %v137 = vpop.f32.mrb[0].mxu0
    %v138 = vadd.f32 %v43, %v137
    %139 = vdwg.mxu0
    %140 = vmatprep.subr.mxu0 %v33
    %141 = vmatpush1.msra.mxu0 %v32
    %142 = vmatprep.subr.mxu0 0.0
    %143 = vmatpush1.msra.mxu0 0.0
    %144 = vmatprep.subr.mxu0 0.0
    %145 = vmatpush1.msra.mxu0 0.0
    %146 = vmatprep.subr.mxu0 0.0
    %147 = vmatpush1.msra.mxu0 0.0
    %148 = vmatprep.subr.mxu0 0.0
    %149 = vmatpush1.msra.mxu0 0.0
    %150 = vmatprep.subr.mxu0 0.0
    %151 = vmatpush1.msra.mxu0 0.0
    %152 = vmatprep.subr.mxu0 0.0
    %153 = vmatpush1.msra.mxu0 0.0
    %154 = vmatprep.subr.mxu0 0.0
    %155 = vmatpush1.msra.mxu0 0.0
    %156 = vmatprep.subr.mxu0 0.0
    %157 = vmatpush1.msra.mxu0 0.0
    %158 = vmatprep.subr.mxu0 0.0
    %159 = vmatpush1.msra.mxu0 0.0
    %160 = vmatprep.subr.mxu0 0.0
    %161 = vmatpush1.msra.mxu0 0.0
    %162 = vmatprep.subr.mxu0 0.0
    %163 = vmatpush1.msra.mxu0 0.0
    %164 = vmatprep.subr.mxu0 0.0
    %165 = vmatpush1.msra.mxu0 0.0
    %166 = vmatprep.subr.mxu0 0.0
    %167 = vmatpush1.msra.mxu0 0.0
    %168 = vmatprep.subr.mxu0 0.0
    %169 = vmatpush1.msra.mxu0 0.0
    %170 = vmatprep.subr.mxu0 0.0
    %171 = vmatpush1.msra.mxu0 0.0
    %172 = vmatprep.subr.mxu0 0.0
    %173 = vmatpush1.msra.mxu0 0.0
    %174 = vmatprep.subr.mxu0 0.0
    %175 = vmatpush1.msra.mxu0 0.0
    %176 = vmatprep.subr.mxu0 0.0
    %177 = vmatpush1.msra.mxu0 0.0
    %178 = vmatprep.subr.mxu0 0.0
    %179 = vmatpush1.msra.mxu0 0.0
    %180 = vmatprep.subr.mxu0 0.0
    %181 = vmatpush1.msra.mxu0 0.0
    %182 = vmatprep.subr.mxu0 0.0
    %183 = vmatpush1.msra.mxu0 0.0
    %184 = vmatprep.subr.mxu0 0.0
    %185 = vmatpush1.msra.mxu0 0.0
    %186 = vmatprep.subr.mxu0 0.0
    %187 = vmatpush1.msra.mxu0 0.0
    %188 = vmatprep.subr.mxu0 0.0
    %189 = vmatpush1.msra.mxu0 0.0
    %190 = vmatprep.subr.mxu0 0.0
    %191 = vmatpush1.msra.mxu0 0.0
    %192 = vmatprep.subr.mxu0 0.0
    %193 = vmatpush1.msra.mxu0 0.0
    %194 = vmatprep.subr.mxu0 0.0
    %195 = vmatpush1.msra.mxu0 0.0
    %196 = vmatprep.subr.mxu0 0.0
    %197 = vmatpush1.msra.mxu0 0.0
    %198 = vmatprep.subr.mxu0 0.0
    %199 = vmatpush1.msra.mxu0 0.0
    %200 = vmatprep.subr.mxu0 0.0
    %201 = vmatpush1.msra.mxu0 0.0
    %202 = vmatprep.subr.mxu0 0.0
    %203 = vmatpush1.msra.mxu0 0.0
    %204 = vmatprep.mubr.f32.mxu0 0.0
    %205 = vmatmul.mubr.f32.gmra.mrb[0].mxu0 %v58
    %v206 = vpop.f32.mrb[0].mxu0
    %v207 = vadd.f32 %v47, %v206
    %v208 = vpop.f32.mrb[0].mxu0
    %v209 = vadd.f32 %v51, %v208
    %210 = vmatprep.mubr.f32.mxu0 0.0
    %211 = vmatmul.mubr.f32.gmra.mrb[0].mxu0 %v61
    %v212 = vpop.f32.mrb[0].mxu0
    %v213 = vadd.f32 %v47, %v212
    %v214 = vpop.f32.mrb[0].mxu0
    %v215 = vadd.f32 %v51, %v214
    %216 = vdwg.mxu0
    %v217 = vmax.f32 %v130, 0.0
    %v218 = vmax.f32 %v132, 0.0
    %v219 = vmax.f32 %v207, 0.0
    %v220 = vmax.f32 %v209, 0.0
    %v221 = vmax.f32 %v136, 0.0
    %v222 = vmax.f32 %v138, 0.0
    %v223 = vmax.f32 %v213, 0.0
    %v224 = vmax.f32 %v215, 0.0
    %v225 = vpack.c.bf16 %v221, %v217
    %v226 = vpack.c.bf16 %v222, %v218
    %v227 = vpack.c.bf16 %v223, %v219
    %v228 = vpack.c.bf16 %v224, %v220
    %v229 = vld [vmem:[%s3] sm:$0xff]
    %v230 = vld [vmem:[%s3 + $0x8] sm:$0xff]
    %v231 = vld [vmem:[%s3 + $0x10] sm:$0xff]
    %v232 = vld [vmem:[%s3 + $0x18] sm:$0xff]
    %v233 = vld [vmem:[%s3 + $0x20] sm:$0xff]
    %v234 = vld [vmem:[%s3 + $0x28] sm:$0xff]
    %v235 = vld [vmem:[%s3 + $0x30] sm:$0xff]
    %v236 = vld [vmem:[%s3 + $0x38] sm:$0xff]
    %v237 = vld [vmem:[%s3 + $0x40] sm:$0xff]
    %v238 = vld [vmem:[%s3 + $0x48] sm:$0xff]
    %v239 = vld [vmem:[%s3 + $0x50] sm:$0xff]
    %v240 = vld [vmem:[%s3 + $0x58] sm:$0xff]
    %v241 = vld [vmem:[%s3 + $0x60] sm:$0xff]
    %v242 = vld [vmem:[%s3 + $0x68] sm:$0xff]
    %v243 = vld [vmem:[%s3 + $0x70] sm:$0xff]
    %v244 = vld [vmem:[%s3 + $0x78] sm:$0xff]
    %v245 = vld [vmem:[%s3 + $0x80] sm:$0xff]
    %v246 = vld [vmem:[%s3 + $0x88] sm:$0xff]
    %v247 = vld [vmem:[%s3 + $0x90] sm:$0xff]
    %v248 = vld [vmem:[%s3 + $0x98] sm:$0xff]
    %v249 = vld [vmem:[%s3 + $0xa0] sm:$0xff]
    %v250 = vld [vmem:[%s3 + $0xa8] sm:$0xff]
    %v251 = vld [vmem:[%s3 + $0xb0] sm:$0xff]
    %v252 = vld [vmem:[%s3 + $0xb8] sm:$0xff]
    %v253 = vld [vmem:[%s3 + $0xc0] sm:$0xff]
    %v254 = vld [vmem:[%s3 + $0xc8] sm:$0xff]
    %v255 = vld [vmem:[%s3 + $0xd0] sm:$0xff]
    %v256 = vld [vmem:[%s3 + $0xd8] sm:$0xff]
    %v257 = vld [vmem:[%s3 + $0xe0] sm:$0xff]
    %v258 = vld [vmem:[%s3 + $0xe8] sm:$0xff]
    %v259 = vld [vmem:[%s3 + $0xf0] sm:$0xff]
    %v260 = vld [vmem:[%s3 + $0xf8] sm:$0xff]
    %v261 = vld [vmem:[%s3 + $0x100] sm:$0xff]
    %v262 = vld [vmem:[%s3 + $0x108] sm:$0xff]
    %v263 = vld [vmem:[%s3 + $0x110] sm:$0xff]
    %v264 = vld [vmem:[%s3 + $0x118] sm:$0xff]
    %v265 = vld [vmem:[%s3 + $0x120] sm:$0xff]
    %v266 = vld [vmem:[%s3 + $0x128] sm:$0xff]
    %v267 = vld [vmem:[%s3 + $0x130] sm:$0xff]
    %v268 = vld [vmem:[%s3 + $0x138] sm:$0xff]
    %v269 = vld [vmem:[%s3 + $0x140] sm:$0xff]
    %v270 = vld [vmem:[%s3 + $0x148] sm:$0xff]
    %v271 = vld [vmem:[%s3 + $0x150] sm:$0xff]
    %v272 = vld [vmem:[%s3 + $0x158] sm:$0xff]
    %v273 = vld [vmem:[%s3 + $0x160] sm:$0xff]
    %v274 = vld [vmem:[%s3 + $0x168] sm:$0xff]
    %v275 = vld [vmem:[%s3 + $0x170] sm:$0xff]
    %v276 = vld [vmem:[%s3 + $0x178] sm:$0xff]
    %v277 = vld [vmem:[%s3 + $0x180] sm:$0xff]
    %v278 = vld [vmem:[%s3 + $0x188] sm:$0xff]
    %v279 = vld [vmem:[%s3 + $0x190] sm:$0xff]
    %v280 = vld [vmem:[%s3 + $0x198] sm:$0xff]
    %v281 = vld [vmem:[%s3 + $0x1a0] sm:$0xff]
    %v282 = vld [vmem:[%s3 + $0x1a8] sm:$0xff]
    %v283 = vld [vmem:[%s3 + $0x1b0] sm:$0xff]
    %v284 = vld [vmem:[%s3 + $0x1b8] sm:$0xff]
    %v285 = vld [vmem:[%s3 + $0x1c0] sm:$0xff]
    %v286 = vld [vmem:[%s3 + $0x1c8] sm:$0xff]
    %v287 = vld [vmem:[%s3 + $0x1d0] sm:$0xff]
    %v288 = vld [vmem:[%s3 + $0x1d8] sm:$0xff]
    %v289 = vld [vmem:[%s3 + $0x1e0] sm:$0xff]
    %v290 = vld [vmem:[%s3 + $0x1e8] sm:$0xff]
    %v291 = vld [vmem:[%s3 + $0x1f0] sm:$0xff]
    %v292 = vld [vmem:[%s3 + $0x1f8] sm:$0xff]
    %v293 = vld [vmem:[%s3 + $0x200] sm:$0xff]
    %v294 = vld [vmem:[%s3 + $0x208] sm:$0xff]
    %v295 = vld [vmem:[%s3 + $0x210] sm:$0xff]
    %v296 = vld [vmem:[%s3 + $0x218] sm:$0xff]
    %v297 = vld [vmem:[%s3 + $0x220] sm:$0xff]
    %v298 = vld [vmem:[%s3 + $0x228] sm:$0xff]
    %v299 = vld [vmem:[%s3 + $0x230] sm:$0xff]
    %v300 = vld [vmem:[%s3 + $0x238] sm:$0xff]
    %v301 = vld [vmem:[%s3 + $0x240] sm:$0xff]
    %v302 = vld [vmem:[%s3 + $0x248] sm:$0xff]
    %v303 = vld [vmem:[%s3 + $0x250] sm:$0xff]
    %v304 = vld [vmem:[%s3 + $0x258] sm:$0xff]
    %v305 = vld [vmem:[%s3 + $0x260] sm:$0xff]
    %v306 = vld [vmem:[%s3 + $0x268] sm:$0xff]
    %v307 = vld [vmem:[%s3 + $0x270] sm:$0xff]
    %v308 = vld [vmem:[%s3 + $0x278] sm:$0xff]
    %v309 = vld [vmem:[%s3 + $0x280] sm:$0xff]
    %v310 = vld [vmem:[%s3 + $0x288] sm:$0xff]
    %v311 = vld [vmem:[%s3 + $0x290] sm:$0xff]
    %v312 = vld [vmem:[%s3 + $0x298] sm:$0xff]
    %v313 = vld [vmem:[%s3 + $0x2a0] sm:$0xff]
    %v314 = vld [vmem:[%s3 + $0x2a8] sm:$0xff]
    %v315 = vld [vmem:[%s3 + $0x2b0] sm:$0xff]
    %v316 = vld [vmem:[%s3 + $0x2b8] sm:$0xff]
    %v317 = vld [vmem:[%s3 + $0x2c0] sm:$0xff]
    %v318 = vld [vmem:[%s3 + $0x2c8] sm:$0xff]
    %v319 = vld [vmem:[%s3 + $0x2d0] sm:$0xff]
    %v320 = vld [vmem:[%s3 + $0x2d8] sm:$0xff]
    %v321 = vld [vmem:[%s3 + $0x2e0] sm:$0xff]
    %v322 = vld [vmem:[%s3 + $0x2e8] sm:$0xff]
    %v323 = vld [vmem:[%s3 + $0x2f0] sm:$0xff]
    %v324 = vld [vmem:[%s3 + $0x2f8] sm:$0xff]
    %v325 = vld [vmem:[%s3 + $0x300] sm:$0xff]
    %v326 = vld [vmem:[%s3 + $0x308] sm:$0xff]
    %v327 = vld [vmem:[%s3 + $0x310] sm:$0xff]
    %v328 = vld [vmem:[%s3 + $0x318] sm:$0xff]
    %v329 = vld [vmem:[%s3 + $0x320] sm:$0xff]
    %v330 = vld [vmem:[%s3 + $0x328] sm:$0xff]
    %v331 = vld [vmem:[%s3 + $0x330] sm:$0xff]
    %v332 = vld [vmem:[%s3 + $0x338] sm:$0xff]
    %v333 = vld [vmem:[%s3 + $0x340] sm:$0xff]
    %v334 = vld [vmem:[%s3 + $0x348] sm:$0xff]
    %v335 = vld [vmem:[%s3 + $0x350] sm:$0xff]
    %v336 = vld [vmem:[%s3 + $0x358] sm:$0xff]
    %v337 = vld [vmem:[%s3 + $0x360] sm:$0xff]
    %v338 = vld [vmem:[%s3 + $0x368] sm:$0xff]
    %v339 = vld [vmem:[%s3 + $0x370] sm:$0xff]
    %v340 = vld [vmem:[%s3 + $0x378] sm:$0xff]
    %v341 = vld [vmem:[%s3 + $0x380] sm:$0xff]
    %v342 = vld [vmem:[%s3 + $0x388] sm:$0xff]
    %v343 = vld [vmem:[%s3 + $0x390] sm:$0xff]
    %v344 = vld [vmem:[%s3 + $0x398] sm:$0xff]
    %v345 = vld [vmem:[%s3 + $0x3a0] sm:$0xff]
    %v346 = vld [vmem:[%s3 + $0x3a8] sm:$0xff]
    %v347 = vld [vmem:[%s3 + $0x3b0] sm:$0xff]
    %v348 = vld [vmem:[%s3 + $0x3b8] sm:$0xff]
    %v349 = vld [vmem:[%s3 + $0x3c0] sm:$0xff]
    %v350 = vld [vmem:[%s3 + $0x3c8] sm:$0xff]
    %v351 = vld [vmem:[%s3 + $0x3d0] sm:$0xff]
    %v352 = vld [vmem:[%s3 + $0x3d8] sm:$0xff]
    %v353 = vld [vmem:[%s3 + $0x3e0] sm:$0xff]
    %v354 = vld [vmem:[%s3 + $0x3e8] sm:$0xff]
    %v355 = vld [vmem:[%s3 + $0x3f0] sm:$0xff]
    %v356 = vld [vmem:[%s3 + $0x3f8] sm:$0xff]
    %v357 = vld [vmem:[%s4] sm:$0xf]
    %v359 = vlaneseq
    %v360 = vshrl.u32 %v359, 7
    %v361 = vsub.s32 0, %v360
    %v362 = vrot.slane %v357, %v361
    %v363 = vlaneseq
    %v364 = vshrl.u32 %v363, 7
    %v365 = vsub.s32 1, %v364
    %v366 = vrot.slane %v357, %v365
    %v367 = vlaneseq
    %v368 = vshrl.u32 %v367, 7
    %v369 = vsub.s32 2, %v368
    %v370 = vrot.slane %v357, %v369
    %v371 = vlaneseq
    %v372 = vshrl.u32 %v371, 7
    %v373 = vsub.s32 3, %v372
    %v374 = vrot.slane %v357, %v373
    %v507 = vunpack.c.l.b16 %v229
    %v508 = vunpack.c.h.b16 %v229
    %v509 = vunpack.c.l.b16 %v230
    %v510 = vunpack.c.h.b16 %v230
    %v511 = vunpack.c.l.b16 %v231
    %v512 = vunpack.c.h.b16 %v231
    %v513 = vunpack.c.l.b16 %v232
    %v514 = vunpack.c.h.b16 %v232
    %v515 = vunpack.c.l.b16 %v233
    %v516 = vunpack.c.h.b16 %v233
    %v517 = vunpack.c.l.b16 %v234
    %v518 = vunpack.c.h.b16 %v234
    %v519 = vunpack.c.l.b16 %v235
    %v520 = vunpack.c.h.b16 %v235
    %v521 = vunpack.c.l.b16 %v236
    %v522 = vunpack.c.h.b16 %v236
    %v523 = vunpack.c.l.b16 %v237
    %v524 = vunpack.c.h.b16 %v237
    %v525 = vunpack.c.l.b16 %v238
    %v526 = vunpack.c.h.b16 %v238
    %v527 = vunpack.c.l.b16 %v239
    %v528 = vunpack.c.h.b16 %v239
    %v529 = vunpack.c.l.b16 %v240
    %v530 = vunpack.c.h.b16 %v240
    %v531 = vunpack.c.l.b16 %v241
    %v532 = vunpack.c.h.b16 %v241
    %v533 = vunpack.c.l.b16 %v242
    %v534 = vunpack.c.h.b16 %v242
    %v535 = vunpack.c.l.b16 %v243
    %v536 = vunpack.c.h.b16 %v243
    %v537 = vunpack.c.l.b16 %v244
    %v538 = vunpack.c.h.b16 %v244
    %v539 = vunpack.c.l.b16 %v245
    %v540 = vunpack.c.h.b16 %v245
    %v541 = vunpack.c.l.b16 %v246
    %v542 = vunpack.c.h.b16 %v246
    %v543 = vunpack.c.l.b16 %v247
    %v544 = vunpack.c.h.b16 %v247
    %v545 = vunpack.c.l.b16 %v248
    %v546 = vunpack.c.h.b16 %v248
    %v547 = vunpack.c.l.b16 %v249
    %v548 = vunpack.c.h.b16 %v249
    %v549 = vunpack.c.l.b16 %v250
    %v550 = vunpack.c.h.b16 %v250
    %v551 = vunpack.c.l.b16 %v251
    %v552 = vunpack.c.h.b16 %v251
    %v553 = vunpack.c.l.b16 %v252
    %v554 = vunpack.c.h.b16 %v252
    %v555 = vunpack.c.l.b16 %v253
    %v556 = vunpack.c.h.b16 %v253
    %v557 = vunpack.c.l.b16 %v254
    %v558 = vunpack.c.h.b16 %v254
    %v559 = vunpack.c.l.b16 %v255
    %v560 = vunpack.c.h.b16 %v255
    %v561 = vunpack.c.l.b16 %v256
    %v562 = vunpack.c.h.b16 %v256
    %v563 = vunpack.c.l.b16 %v257
    %v564 = vunpack.c.h.b16 %v257
    %v565 = vunpack.c.l.b16 %v258
    %v566 = vunpack.c.h.b16 %v258
    %v567 = vunpack.c.l.b16 %v259
    %v568 = vunpack.c.h.b16 %v259
    %v569 = vunpack.c.l.b16 %v260
    %v570 = vunpack.c.h.b16 %v260
    %v571 = vunpack.c.l.b16 %v261
    %v572 = vunpack.c.h.b16 %v261
    %v573 = vunpack.c.l.b16 %v262
    %v574 = vunpack.c.h.b16 %v262
    %v575 = vunpack.c.l.b16 %v263
    %v576 = vunpack.c.h.b16 %v263
    %v577 = vunpack.c.l.b16 %v264
    %v578 = vunpack.c.h.b16 %v264
    %v579 = vunpack.c.l.b16 %v265
    %v580 = vunpack.c.h.b16 %v265
    %v581 = vunpack.c.l.b16 %v266
    %v582 = vunpack.c.h.b16 %v266
    %v583 = vunpack.c.l.b16 %v267
    %v584 = vunpack.c.h.b16 %v267
    %v585 = vunpack.c.l.b16 %v268
    %v586 = vunpack.c.h.b16 %v268
    %v587 = vunpack.c.l.b16 %v269
    %v588 = vunpack.c.h.b16 %v269
    %v589 = vunpack.c.l.b16 %v270
    %v590 = vunpack.c.h.b16 %v270
    %v591 = vunpack.c.l.b16 %v271
    %v592 = vunpack.c.h.b16 %v271
    %v593 = vunpack.c.l.b16 %v272
    %v594 = vunpack.c.h.b16 %v272
    %v595 = vunpack.c.l.b16 %v273
    %v596 = vunpack.c.h.b16 %v273
    %v597 = vunpack.c.l.b16 %v274
    %v598 = vunpack.c.h.b16 %v274
    %v599 = vunpack.c.l.b16 %v275
    %v600 = vunpack.c.h.b16 %v275
    %v601 = vunpack.c.l.b16 %v276
    %v602 = vunpack.c.h.b16 %v276
    %v603 = vunpack.c.l.b16 %v277
    %v604 = vunpack.c.h.b16 %v277
    %v605 = vunpack.c.l.b16 %v278
    %v606 = vunpack.c.h.b16 %v278
    %v607 = vunpack.c.l.b16 %v279
    %v608 = vunpack.c.h.b16 %v279
    %v609 = vunpack.c.l.b16 %v280
    %v610 = vunpack.c.h.b16 %v280
    %v611 = vunpack.c.l.b16 %v281
    %v612 = vunpack.c.h.b16 %v281
    %v613 = vunpack.c.l.b16 %v282
    %v614 = vunpack.c.h.b16 %v282
    %v615 = vunpack.c.l.b16 %v283
    %v616 = vunpack.c.h.b16 %v283
    %v617 = vunpack.c.l.b16 %v284
    %v618 = vunpack.c.h.b16 %v284
    %v619 = vunpack.c.l.b16 %v285
    %v620 = vunpack.c.h.b16 %v285
    %v621 = vunpack.c.l.b16 %v286
    %v622 = vunpack.c.h.b16 %v286
    %v623 = vunpack.c.l.b16 %v287
    %v624 = vunpack.c.h.b16 %v287
    %v625 = vunpack.c.l.b16 %v288
    %v626 = vunpack.c.h.b16 %v288
    %v627 = vunpack.c.l.b16 %v289
    %v628 = vunpack.c.h.b16 %v289
    %v629 = vunpack.c.l.b16 %v290
    %v630 = vunpack.c.h.b16 %v290
    %v631 = vunpack.c.l.b16 %v291
    %v632 = vunpack.c.h.b16 %v291
    %v633 = vunpack.c.l.b16 %v292
    %v634 = vunpack.c.h.b16 %v292
    %v635 = vunpack.c.l.b16 %v293
    %v636 = vunpack.c.h.b16 %v293
    %v637 = vunpack.c.l.b16 %v294
    %v638 = vunpack.c.h.b16 %v294
    %v639 = vunpack.c.l.b16 %v295
    %v640 = vunpack.c.h.b16 %v295
    %v641 = vunpack.c.l.b16 %v296
    %v642 = vunpack.c.h.b16 %v296
    %v643 = vunpack.c.l.b16 %v297
    %v644 = vunpack.c.h.b16 %v297
    %v645 = vunpack.c.l.b16 %v298
    %v646 = vunpack.c.h.b16 %v298
    %v647 = vunpack.c.l.b16 %v299
    %v648 = vunpack.c.h.b16 %v299
    %v649 = vunpack.c.l.b16 %v300
    %v650 = vunpack.c.h.b16 %v300
    %v651 = vunpack.c.l.b16 %v301
    %v652 = vunpack.c.h.b16 %v301
    %v653 = vunpack.c.l.b16 %v302
    %v654 = vunpack.c.h.b16 %v302
    %v655 = vunpack.c.l.b16 %v303
    %v656 = vunpack.c.h.b16 %v303
    %v657 = vunpack.c.l.b16 %v304
    %v658 = vunpack.c.h.b16 %v304
    %v659 = vunpack.c.l.b16 %v305
    %v660 = vunpack.c.h.b16 %v305
    %v661 = vunpack.c.l.b16 %v306
    %v662 = vunpack.c.h.b16 %v306
    %v663 = vunpack.c.l.b16 %v307
    %v664 = vunpack.c.h.b16 %v307
    %v665 = vunpack.c.l.b16 %v308
    %v666 = vunpack.c.h.b16 %v308
    %v667 = vunpack.c.l.b16 %v309
    %v668 = vunpack.c.h.b16 %v309
    %v669 = vunpack.c.l.b16 %v310
    %v670 = vunpack.c.h.b16 %v310
    %v671 = vunpack.c.l.b16 %v311
    %v672 = vunpack.c.h.b16 %v311
    %v673 = vunpack.c.l.b16 %v312
    %v674 = vunpack.c.h.b16 %v312
    %v675 = vunpack.c.l.b16 %v313
    %v676 = vunpack.c.h.b16 %v313
    %v677 = vunpack.c.l.b16 %v314
    %v678 = vunpack.c.h.b16 %v314
    %v679 = vunpack.c.l.b16 %v315
    %v680 = vunpack.c.h.b16 %v315
    %v681 = vunpack.c.l.b16 %v316
    %v682 = vunpack.c.h.b16 %v316
    %v683 = vunpack.c.l.b16 %v317
    %v684 = vunpack.c.h.b16 %v317
    %v685 = vunpack.c.l.b16 %v318
    %v686 = vunpack.c.h.b16 %v318
    %v687 = vunpack.c.l.b16 %v319
    %v688 = vunpack.c.h.b16 %v319
    %v689 = vunpack.c.l.b16 %v320
    %v690 = vunpack.c.h.b16 %v320
    %v691 = vunpack.c.l.b16 %v321
    %v692 = vunpack.c.h.b16 %v321
    %v693 = vunpack.c.l.b16 %v322
    %v694 = vunpack.c.h.b16 %v322
    %v695 = vunpack.c.l.b16 %v323
    %v696 = vunpack.c.h.b16 %v323
    %v697 = vunpack.c.l.b16 %v324
    %v698 = vunpack.c.h.b16 %v324
    %v699 = vunpack.c.l.b16 %v325
    %v700 = vunpack.c.h.b16 %v325
    %v701 = vunpack.c.l.b16 %v326
    %v702 = vunpack.c.h.b16 %v326
    %v703 = vunpack.c.l.b16 %v327
    %v704 = vunpack.c.h.b16 %v327
    %v705 = vunpack.c.l.b16 %v328
    %v706 = vunpack.c.h.b16 %v328
    %v707 = vunpack.c.l.b16 %v329
    %v708 = vunpack.c.h.b16 %v329
    %v709 = vunpack.c.l.b16 %v330
    %v710 = vunpack.c.h.b16 %v330
    %v711 = vunpack.c.l.b16 %v331
    %v712 = vunpack.c.h.b16 %v331
    %v713 = vunpack.c.l.b16 %v332
    %v714 = vunpack.c.h.b16 %v332
    %v715 = vunpack.c.l.b16 %v333
    %v716 = vunpack.c.h.b16 %v333
    %v717 = vunpack.c.l.b16 %v334
    %v718 = vunpack.c.h.b16 %v334
    %v719 = vunpack.c.l.b16 %v335
    %v720 = vunpack.c.h.b16 %v335
    %v721 = vunpack.c.l.b16 %v336
    %v722 = vunpack.c.h.b16 %v336
    %v723 = vunpack.c.l.b16 %v337
    %v724 = vunpack.c.h.b16 %v337
    %v725 = vunpack.c.l.b16 %v338
    %v726 = vunpack.c.h.b16 %v338
    %v727 = vunpack.c.l.b16 %v339
    %v728 = vunpack.c.h.b16 %v339
    %v729 = vunpack.c.l.b16 %v340
    %v730 = vunpack.c.h.b16 %v340
    %v731 = vunpack.c.l.b16 %v341
    %v732 = vunpack.c.h.b16 %v341
    %v733 = vunpack.c.l.b16 %v342
    %v734 = vunpack.c.h.b16 %v342
    %v735 = vunpack.c.l.b16 %v343
    %v736 = vunpack.c.h.b16 %v343
    %v737 = vunpack.c.l.b16 %v344
    %v738 = vunpack.c.h.b16 %v344
    %v739 = vunpack.c.l.b16 %v345
    %v740 = vunpack.c.h.b16 %v345
    %v741 = vunpack.c.l.b16 %v346
    %v742 = vunpack.c.h.b16 %v346
    %v743 = vunpack.c.l.b16 %v347
    %v744 = vunpack.c.h.b16 %v347
    %v745 = vunpack.c.l.b16 %v348
    %v746 = vunpack.c.h.b16 %v348
    %v747 = vunpack.c.l.b16 %v349
    %v748 = vunpack.c.h.b16 %v349
    %v749 = vunpack.c.l.b16 %v350
    %v750 = vunpack.c.h.b16 %v350
    %v751 = vunpack.c.l.b16 %v351
    %v752 = vunpack.c.h.b16 %v351
    %v753 = vunpack.c.l.b16 %v352
    %v754 = vunpack.c.h.b16 %v352
    %v755 = vunpack.c.l.b16 %v353
    %v756 = vunpack.c.h.b16 %v353
    %v757 = vunpack.c.l.b16 %v354
    %v758 = vunpack.c.h.b16 %v354
    %v759 = vunpack.c.l.b16 %v355
    %v760 = vunpack.c.h.b16 %v355
    %v761 = vunpack.c.l.b16 %v356
    %v762 = vunpack.c.h.b16 %v356
    %v763 = vpack.c.b16 %v511, %v507
    %v764 = vpack.c.b16 %v512, %v508
    %v765 = vpack.c.b16 %v513, %v509
    %v766 = vpack.c.b16 %v514, %v510
    %v767 = vpack.c.b16 %v519, %v515
    %v768 = vpack.c.b16 %v520, %v516
    %v769 = vpack.c.b16 %v521, %v517
    %v770 = vpack.c.b16 %v522, %v518
    %v771 = vpack.c.b16 %v527, %v523
    %v772 = vpack.c.b16 %v528, %v524
    %v773 = vpack.c.b16 %v529, %v525
    %v774 = vpack.c.b16 %v530, %v526
    %v775 = vpack.c.b16 %v535, %v531
    %v776 = vpack.c.b16 %v536, %v532
    %v777 = vpack.c.b16 %v537, %v533
    %v778 = vpack.c.b16 %v538, %v534
    %v779 = vpack.c.b16 %v543, %v539
    %v780 = vpack.c.b16 %v544, %v540
    %v781 = vpack.c.b16 %v545, %v541
    %v782 = vpack.c.b16 %v546, %v542
    %v783 = vpack.c.b16 %v551, %v547
    %v784 = vpack.c.b16 %v552, %v548
    %v785 = vpack.c.b16 %v553, %v549
    %v786 = vpack.c.b16 %v554, %v550
    %v787 = vpack.c.b16 %v559, %v555
    %v788 = vpack.c.b16 %v560, %v556
    %v789 = vpack.c.b16 %v561, %v557
    %v790 = vpack.c.b16 %v562, %v558
    %v791 = vpack.c.b16 %v567, %v563
    %v792 = vpack.c.b16 %v568, %v564
    %v793 = vpack.c.b16 %v569, %v565
    %v794 = vpack.c.b16 %v570, %v566
    %v795 = vpack.c.b16 %v575, %v571
    %v796 = vpack.c.b16 %v576, %v572
    %v797 = vpack.c.b16 %v577, %v573
    %v798 = vpack.c.b16 %v578, %v574
    %v799 = vpack.c.b16 %v583, %v579
    %v800 = vpack.c.b16 %v584, %v580
    %v801 = vpack.c.b16 %v585, %v581
    %v802 = vpack.c.b16 %v586, %v582
    %v803 = vpack.c.b16 %v591, %v587
    %v804 = vpack.c.b16 %v592, %v588
    %v805 = vpack.c.b16 %v593, %v589
    %v806 = vpack.c.b16 %v594, %v590
    %v807 = vpack.c.b16 %v599, %v595
    %v808 = vpack.c.b16 %v600, %v596
    %v809 = vpack.c.b16 %v601, %v597
    %v810 = vpack.c.b16 %v602, %v598
    %v811 = vpack.c.b16 %v607, %v603
    %v812 = vpack.c.b16 %v608, %v604
    %v813 = vpack.c.b16 %v609, %v605
    %v814 = vpack.c.b16 %v610, %v606
    %v815 = vpack.c.b16 %v615, %v611
    %v816 = vpack.c.b16 %v616, %v612
    %v817 = vpack.c.b16 %v617, %v613
    %v818 = vpack.c.b16 %v618, %v614
    %v819 = vpack.c.b16 %v623, %v619
    %v820 = vpack.c.b16 %v624, %v620
    %v821 = vpack.c.b16 %v625, %v621
    %v822 = vpack.c.b16 %v626, %v622
    %v823 = vpack.c.b16 %v631, %v627
    %v824 = vpack.c.b16 %v632, %v628
    %v825 = vpack.c.b16 %v633, %v629
    %v826 = vpack.c.b16 %v634, %v630
    %v827 = vpack.c.b16 %v639, %v635
    %v828 = vpack.c.b16 %v640, %v636
    %v829 = vpack.c.b16 %v641, %v637
    %v830 = vpack.c.b16 %v642, %v638
    %v831 = vpack.c.b16 %v647, %v643
    %v832 = vpack.c.b16 %v648, %v644
    %v833 = vpack.c.b16 %v649, %v645
    %v834 = vpack.c.b16 %v650, %v646
    %v835 = vpack.c.b16 %v655, %v651
    %v836 = vpack.c.b16 %v656, %v652
    %v837 = vpack.c.b16 %v657, %v653
    %v838 = vpack.c.b16 %v658, %v654
    %v839 = vpack.c.b16 %v663, %v659
    %v840 = vpack.c.b16 %v664, %v660
    %v841 = vpack.c.b16 %v665, %v661
    %v842 = vpack.c.b16 %v666, %v662
    %v843 = vpack.c.b16 %v671, %v667
    %v844 = vpack.c.b16 %v672, %v668
    %v845 = vpack.c.b16 %v673, %v669
    %v846 = vpack.c.b16 %v674, %v670
    %v847 = vpack.c.b16 %v679, %v675
    %v848 = vpack.c.b16 %v680, %v676
    %v849 = vpack.c.b16 %v681, %v677
    %v850 = vpack.c.b16 %v682, %v678
    %v851 = vpack.c.b16 %v687, %v683
    %v852 = vpack.c.b16 %v688, %v684
    %v853 = vpack.c.b16 %v689, %v685
    %v854 = vpack.c.b16 %v690, %v686
    %v855 = vpack.c.b16 %v695, %v691
    %v856 = vpack.c.b16 %v696, %v692
    %v857 = vpack.c.b16 %v697, %v693
    %v858 = vpack.c.b16 %v698, %v694
    %v859 = vpack.c.b16 %v703, %v699
    %v860 = vpack.c.b16 %v704, %v700
    %v861 = vpack.c.b16 %v705, %v701
    %v862 = vpack.c.b16 %v706, %v702
    %v863 = vpack.c.b16 %v711, %v707
    %v864 = vpack.c.b16 %v712, %v708
    %v865 = vpack.c.b16 %v713, %v709
    %v866 = vpack.c.b16 %v714, %v710
    %v867 = vpack.c.b16 %v719, %v715
    %v868 = vpack.c.b16 %v720, %v716
    %v869 = vpack.c.b16 %v721, %v717
    %v870 = vpack.c.b16 %v722, %v718
    %v871 = vpack.c.b16 %v727, %v723
    %v872 = vpack.c.b16 %v728, %v724
    %v873 = vpack.c.b16 %v729, %v725
    %v874 = vpack.c.b16 %v730, %v726
    %v875 = vpack.c.b16 %v735, %v731
    %v876 = vpack.c.b16 %v736, %v732
    %v877 = vpack.c.b16 %v737, %v733
    %v878 = vpack.c.b16 %v738, %v734
    %v879 = vpack.c.b16 %v743, %v739
    %v880 = vpack.c.b16 %v744, %v740
    %v881 = vpack.c.b16 %v745, %v741
    %v882 = vpack.c.b16 %v746, %v742
    %v883 = vpack.c.b16 %v751, %v747
    %v884 = vpack.c.b16 %v752, %v748
    %v885 = vpack.c.b16 %v753, %v749
    %v886 = vpack.c.b16 %v754, %v750
    %v887 = vpack.c.b16 %v759, %v755
    %v888 = vpack.c.b16 %v760, %v756
    %v889 = vpack.c.b16 %v761, %v757
    %v890 = vpack.c.b16 %v762, %v758
    %1019 = vmatprep.subr.bf16.mxu0 %v764
    %1020 = vmatpush1.bf16.msra.mxu0 %v763
    %1021 = vmatprep.subr.bf16.mxu0 %v768
    %1022 = vmatpush1.bf16.msra.mxu0 %v767
    %1023 = vmatprep.subr.bf16.mxu0 %v772
    %1024 = vmatpush1.bf16.msra.mxu0 %v771
    %1025 = vmatprep.subr.bf16.mxu0 %v776
    %1026 = vmatpush1.bf16.msra.mxu0 %v775
    %1027 = vmatprep.subr.bf16.mxu0 %v780
    %1028 = vmatpush1.bf16.msra.mxu0 %v779
    %1029 = vmatprep.subr.bf16.mxu0 %v784
    %1030 = vmatpush1.bf16.msra.mxu0 %v783
    %1031 = vmatprep.subr.bf16.mxu0 %v788
    %1032 = vmatpush1.bf16.msra.mxu0 %v787
    %1033 = vmatprep.subr.bf16.mxu0 %v792
    %1034 = vmatpush1.bf16.msra.mxu0 %v791
    %1035 = vmatprep.subr.bf16.mxu0 %v796
    %1036 = vmatpush1.bf16.msra.mxu0 %v795
    %1037 = vmatprep.subr.bf16.mxu0 %v800
    %1038 = vmatpush1.bf16.msra.mxu0 %v799
    %1039 = vmatprep.subr.bf16.mxu0 %v804
    %1040 = vmatpush1.bf16.msra.mxu0 %v803
    %1041 = vmatprep.subr.bf16.mxu0 %v808
    %1042 = vmatpush1.bf16.msra.mxu0 %v807
    %1043 = vmatprep.subr.bf16.mxu0 %v812
    %1044 = vmatpush1.bf16.msra.mxu0 %v811
    %1045 = vmatprep.subr.bf16.mxu0 %v816
    %1046 = vmatpush1.bf16.msra.mxu0 %v815
    %1047 = vmatprep.subr.bf16.mxu0 %v820
    %1048 = vmatpush1.bf16.msra.mxu0 %v819
    %1049 = vmatprep.subr.bf16.mxu0 %v824
    %1050 = vmatpush1.bf16.msra.mxu0 %v823
    %1051 = vmatprep.mubr.bf16.mxu0 %v226
    %1052 = vmatmul.mubr.bf16.gmra.mrb[0].mxu0 %v225
    %v1053 = vpop.f32.mrb[0].mxu0
    %v1054 = vadd.f32 %v362, %v1053
    %v1055 = vpop.f32.mrb[0].mxu0
    %v1056 = vadd.f32 %v366, %v1055
    %v1057 = vpop.f32.mrb[0].mxu0
    %v1058 = vadd.f32 %v362, %v1057
    %v1059 = vpop.f32.mrb[0].mxu0
    %v1060 = vadd.f32 %v366, %v1059
    %1061 = vdwg.mxu0
    %1062 = vmatprep.subr.bf16.mxu0 %v828
    %1063 = vmatpush1.bf16.msra.mxu0 %v827
    %1064 = vmatprep.subr.bf16.mxu0 %v832
    %1065 = vmatpush1.bf16.msra.mxu0 %v831
    %1066 = vmatprep.subr.bf16.mxu0 %v836
    %1067 = vmatpush1.bf16.msra.mxu0 %v835
    %1068 = vmatprep.subr.bf16.mxu0 %v840
    %1069 = vmatpush1.bf16.msra.mxu0 %v839
    %1070 = vmatprep.subr.bf16.mxu0 %v844
    %1071 = vmatpush1.bf16.msra.mxu0 %v843
    %1072 = vmatprep.subr.bf16.mxu0 %v848
    %1073 = vmatpush1.bf16.msra.mxu0 %v847
    %1074 = vmatprep.subr.bf16.mxu0 %v852
    %1075 = vmatpush1.bf16.msra.mxu0 %v851
    %1076 = vmatprep.subr.bf16.mxu0 %v856
    %1077 = vmatpush1.bf16.msra.mxu0 %v855
    %1078 = vmatprep.subr.bf16.mxu0 %v860
    %1079 = vmatpush1.bf16.msra.mxu0 %v859
    %1080 = vmatprep.subr.bf16.mxu0 %v864
    %1081 = vmatpush1.bf16.msra.mxu0 %v863
    %1082 = vmatprep.subr.bf16.mxu0 %v868
    %1083 = vmatpush1.bf16.msra.mxu0 %v867
    %1084 = vmatprep.subr.bf16.mxu0 %v872
    %1085 = vmatpush1.bf16.msra.mxu0 %v871
    %1086 = vmatprep.subr.bf16.mxu0 %v876
    %1087 = vmatpush1.bf16.msra.mxu0 %v875
    %1088 = vmatprep.subr.bf16.mxu0 %v880
    %1089 = vmatpush1.bf16.msra.mxu0 %v879
    %1090 = vmatprep.subr.bf16.mxu0 %v884
    %1091 = vmatpush1.bf16.msra.mxu0 %v883
    %1092 = vmatprep.subr.bf16.mxu0 %v888
    %1093 = vmatpush1.bf16.msra.mxu0 %v887
    %1094 = vmatprep.mubr.bf16.mxu0 %v228
    %1095 = vmatmul.mubr.bf16.gmra.mrb[0].mxu0 %v227
    %v1096 = vpop.f32.mrb[0].mxu0
    %v1097 = vadd.f32 %v1054, %v1096
    %v1098 = vpop.f32.mrb[0].mxu0
    %v1099 = vadd.f32 %v1056, %v1098
    %v1100 = vpop.f32.mrb[0].mxu0
    %v1101 = vadd.f32 %v1058, %v1100
    %v1102 = vpop.f32.mrb[0].mxu0
    %v1103 = vadd.f32 %v1060, %v1102
    %1104 = vdwg.mxu0
    %1105 = vmatprep.subr.bf16.mxu0 %v766
    %1106 = vmatpush1.bf16.msra.mxu0 %v765
    %1107 = vmatprep.subr.bf16.mxu0 %v770
    %1108 = vmatpush1.bf16.msra.mxu0 %v769
    %1109 = vmatprep.subr.bf16.mxu0 %v774
    %1110 = vmatpush1.bf16.msra.mxu0 %v773
    %1111 = vmatprep.subr.bf16.mxu0 %v778
    %1112 = vmatpush1.bf16.msra.mxu0 %v777
    %1113 = vmatprep.subr.bf16.mxu0 %v782
    %1114 = vmatpush1.bf16.msra.mxu0 %v781
    %1115 = vmatprep.subr.bf16.mxu0 %v786
    %1116 = vmatpush1.bf16.msra.mxu0 %v785
    %1117 = vmatprep.subr.bf16.mxu0 %v790
    %1118 = vmatpush1.bf16.msra.mxu0 %v789
    %1119 = vmatprep.subr.bf16.mxu0 %v794
    %1120 = vmatpush1.bf16.msra.mxu0 %v793
    %1121 = vmatprep.subr.bf16.mxu0 %v798
    %1122 = vmatpush1.bf16.msra.mxu0 %v797
    %1123 = vmatprep.subr.bf16.mxu0 %v802
    %1124 = vmatpush1.bf16.msra.mxu0 %v801
    %1125 = vmatprep.subr.bf16.mxu0 %v806
    %1126 = vmatpush1.bf16.msra.mxu0 %v805
    %1127 = vmatprep.subr.bf16.mxu0 %v810
    %1128 = vmatpush1.bf16.msra.mxu0 %v809
    %1129 = vmatprep.subr.bf16.mxu0 %v814
    %1130 = vmatpush1.bf16.msra.mxu0 %v813
    %1131 = vmatprep.subr.bf16.mxu0 %v818
    %1132 = vmatpush1.bf16.msra.mxu0 %v817
    %1133 = vmatprep.subr.bf16.mxu0 %v822
    %1134 = vmatpush1.bf16.msra.mxu0 %v821
    %1135 = vmatprep.subr.bf16.mxu0 %v826
    %1136 = vmatpush1.bf16.msra.mxu0 %v825
    %1137 = vmatprep.mubr.bf16.mxu0 %v226
    %1138 = vmatmul.mubr.bf16.gmra.mrb[0].mxu0 %v225
    %v1139 = vpop.f32.mrb[0].mxu0
    %v1140 = vadd.f32 %v370, %v1139
    %v1141 = vpop.f32.mrb[0].mxu0
    %v1142 = vadd.f32 %v374, %v1141
    %v1143 = vpop.f32.mrb[0].mxu0
    %v1144 = vadd.f32 %v370, %v1143
    %v1145 = vpop.f32.mrb[0].mxu0
    %v1146 = vadd.f32 %v374, %v1145
    %1147 = vdwg.mxu0
    %1148 = vmatprep.subr.bf16.mxu0 %v830
    %1149 = vmatpush1.bf16.msra.mxu0 %v829
    %1150 = vmatprep.subr.bf16.mxu0 %v834
    %1151 = vmatpush1.bf16.msra.mxu0 %v833
    %1152 = vmatprep.subr.bf16.mxu0 %v838
    %1153 = vmatpush1.bf16.msra.mxu0 %v837
    %1154 = vmatprep.subr.bf16.mxu0 %v842
    %1155 = vmatpush1.bf16.msra.mxu0 %v841
    %1156 = vmatprep.subr.bf16.mxu0 %v846
    %1157 = vmatpush1.bf16.msra.mxu0 %v845
    %1158 = vmatprep.subr.bf16.mxu0 %v850
    %1159 = vmatpush1.bf16.msra.mxu0 %v849
    %1160 = vmatprep.subr.bf16.mxu0 %v854
    %1161 = vmatpush1.bf16.msra.mxu0 %v853
    %1162 = vmatprep.subr.bf16.mxu0 %v858
    %1163 = vmatpush1.bf16.msra.mxu0 %v857
    %1164 = vmatprep.subr.bf16.mxu0 %v862
    %1165 = vmatpush1.bf16.msra.mxu0 %v861
    %1166 = vmatprep.subr.bf16.mxu0 %v866
    %1167 = vmatpush1.bf16.msra.mxu0 %v865
    %1168 = vmatprep.subr.bf16.mxu0 %v870
    %1169 = vmatpush1.bf16.msra.mxu0 %v869
    %1170 = vmatprep.subr.bf16.mxu0 %v874
    %1171 = vmatpush1.bf16.msra.mxu0 %v873
    %1172 = vmatprep.subr.bf16.mxu0 %v878
    %1173 = vmatpush1.bf16.msra.mxu0 %v877
    %1174 = vmatprep.subr.bf16.mxu0 %v882
    %1175 = vmatpush1.bf16.msra.mxu0 %v881
    %1176 = vmatprep.subr.bf16.mxu0 %v886
    %1177 = vmatpush1.bf16.msra.mxu0 %v885
    %1178 = vmatprep.subr.bf16.mxu0 %v890
    %1179 = vmatpush1.bf16.msra.mxu0 %v889
    %1180 = vmatprep.mubr.bf16.mxu0 %v228
    %1181 = vmatmul.mubr.bf16.gmra.mrb[0].mxu0 %v227
    %v1182 = vpop.f32.mrb[0].mxu0
    %v1183 = vadd.f32 %v1140, %v1182
    %v1184 = vpop.f32.mrb[0].mxu0
    %v1185 = vadd.f32 %v1142, %v1184
    %v1186 = vpop.f32.mrb[0].mxu0
    %v1187 = vadd.f32 %v1144, %v1186
    %v1188 = vpop.f32.mrb[0].mxu0
    %v1189 = vadd.f32 %v1146, %v1188
    %1190 = vdwg.mxu0
    %v1191 = vmax.f32 %v1097, 0.0
    %v1192 = vmax.f32 %v1099, 0.0
    %v1193 = vmax.f32 %v1183, 0.0
    %v1194 = vmax.f32 %v1185, 0.0
    %v1195 = vmax.f32 %v1101, 0.0
    %v1196 = vmax.f32 %v1103, 0.0
    %v1197 = vmax.f32 %v1187, 0.0
    %v1198 = vmax.f32 %v1189, 0.0
    %v1199 = vpack.c.bf16 %v1195, %v1191
    %v1200 = vpack.c.bf16 %v1196, %v1192
    %v1201 = vpack.c.bf16 %v1197, %v1193
    %v1202 = vpack.c.bf16 %v1198, %v1194
    %v1203 = vld [vmem:[%s5] sm:$0xff]
    %v1204 = vld [vmem:[%s5 + $0x8] sm:$0xff]
    %v1205 = vld [vmem:[%s5 + $0x10] sm:$0xff]
    %v1206 = vld [vmem:[%s5 + $0x18] sm:$0xf]
    %v1207 = vld [vmem:[%s5 + $0x1c] sm:$0xff]
    %v1208 = vld [vmem:[%s5 + $0x24] sm:$0xff]
    %v1209 = vld [vmem:[%s5 + $0x2c] sm:$0xff]
    %v1210 = vld [vmem:[%s5 + $0x34] sm:$0xf]
    %v1211 = vld [vmem:[%s5 + $0x38] sm:$0xff]
    %v1212 = vld [vmem:[%s5 + $0x40] sm:$0xff]
    %v1213 = vld [vmem:[%s5 + $0x48] sm:$0xff]
    %v1214 = vld [vmem:[%s5 + $0x50] sm:$0xf]
    %v1215 = vld [vmem:[%s5 + $0x54] sm:$0xff]
    %v1216 = vld [vmem:[%s5 + $0x5c] sm:$0xff]
    %v1217 = vld [vmem:[%s5 + $0x64] sm:$0xff]
    %v1218 = vld [vmem:[%s5 + $0x6c] sm:$0xf]
    %v1219 = vld [vmem:[%s5 + $0x70] sm:$0xff]
    %v1220 = vld [vmem:[%s5 + $0x78] sm:$0xff]
    %v1221 = vld [vmem:[%s5 + $0x80] sm:$0xff]
    %v1222 = vld [vmem:[%s5 + $0x88] sm:$0xf]
    %v1223 = vld [vmem:[%s5 + $0x8c] sm:$0xff]
    %v1224 = vld [vmem:[%s5 + $0x94] sm:$0xff]
    %v1225 = vld [vmem:[%s5 + $0x9c] sm:$0xff]
    %v1226 = vld [vmem:[%s5 + $0xa4] sm:$0xf]
    %v1227 = vld [vmem:[%s5 + $0xa8] sm:$0xff]
    %v1228 = vld [vmem:[%s5 + $0xb0] sm:$0xff]
    %v1229 = vld [vmem:[%s5 + $0xb8] sm:$0xff]
    %v1230 = vld [vmem:[%s5 + $0xc0] sm:$0xf]
    %v1231 = vld [vmem:[%s5 + $0xc4] sm:$0xff]
    %v1232 = vld [vmem:[%s5 + $0xcc] sm:$0xff]
    %v1233 = vld [vmem:[%s5 + $0xd4] sm:$0xff]
    %v1234 = vld [vmem:[%s5 + $0xdc] sm:$0xf]
    %v1235 = vld [vmem:[%s5 + $0xe0] sm:$0xff]
    %v1236 = vld [vmem:[%s5 + $0xe8] sm:$0xff]
    %v1237 = vld [vmem:[%s5 + $0xf0] sm:$0xff]
    %v1238 = vld [vmem:[%s5 + $0xf8] sm:$0xf]
    %v1239 = vld [vmem:[%s5 + $0xfc] sm:$0xff]
    %v1240 = vld [vmem:[%s5 + $0x104] sm:$0xff]
    %v1241 = vld [vmem:[%s5 + $0x10c] sm:$0xff]
    %v1242 = vld [vmem:[%s5 + $0x114] sm:$0xf]
    %v1243 = vld [vmem:[%s5 + $0x118] sm:$0xff]
    %v1244 = vld [vmem:[%s5 + $0x120] sm:$0xff]
    %v1245 = vld [vmem:[%s5 + $0x128] sm:$0xff]
    %v1246 = vld [vmem:[%s5 + $0x130] sm:$0xf]
    %v1247 = vld [vmem:[%s5 + $0x134] sm:$0xff]
    %v1248 = vld [vmem:[%s5 + $0x13c] sm:$0xff]
    %v1249 = vld [vmem:[%s5 + $0x144] sm:$0xff]
    %v1250 = vld [vmem:[%s5 + $0x14c] sm:$0xf]
    %v1251 = vld [vmem:[%s5 + $0x150] sm:$0xff]
    %v1252 = vld [vmem:[%s5 + $0x158] sm:$0xff]
    %v1253 = vld [vmem:[%s5 + $0x160] sm:$0xff]
    %v1254 = vld [vmem:[%s5 + $0x168] sm:$0xf]
    %v1255 = vld [vmem:[%s5 + $0x16c] sm:$0xff]
    %v1256 = vld [vmem:[%s5 + $0x174] sm:$0xff]
    %v1257 = vld [vmem:[%s5 + $0x17c] sm:$0xff]
    %v1258 = vld [vmem:[%s5 + $0x184] sm:$0xf]
    %v1259 = vld [vmem:[%s5 + $0x188] sm:$0xff]
    %v1260 = vld [vmem:[%s5 + $0x190] sm:$0xff]
    %v1261 = vld [vmem:[%s5 + $0x198] sm:$0xff]
    %v1262 = vld [vmem:[%s5 + $0x1a0] sm:$0xf]
    %v1263 = vld [vmem:[%s5 + $0x1a4] sm:$0xff]
    %v1264 = vld [vmem:[%s5 + $0x1ac] sm:$0xff]
    %v1265 = vld [vmem:[%s5 + $0x1b4] sm:$0xff]
    %v1266 = vld [vmem:[%s5 + $0x1bc] sm:$0xf]
    %v1267 = vld [vmem:[%s5 + $0x1c0] sm:$0xff]
    %v1268 = vld [vmem:[%s5 + $0x1c8] sm:$0xff]
    %v1269 = vld [vmem:[%s5 + $0x1d0] sm:$0xff]
    %v1270 = vld [vmem:[%s5 + $0x1d8] sm:$0xf]
    %v1271 = vld [vmem:[%s5 + $0x1dc] sm:$0xff]
    %v1272 = vld [vmem:[%s5 + $0x1e4] sm:$0xff]
    %v1273 = vld [vmem:[%s5 + $0x1ec] sm:$0xff]
    %v1274 = vld [vmem:[%s5 + $0x1f4] sm:$0xf]
    %v1275 = vld [vmem:[%s5 + $0x1f8] sm:$0xff]
    %v1276 = vld [vmem:[%s5 + $0x200] sm:$0xff]
    %v1277 = vld [vmem:[%s5 + $0x208] sm:$0xff]
    %v1278 = vld [vmem:[%s5 + $0x210] sm:$0xf]
    %v1279 = vld [vmem:[%s5 + $0x214] sm:$0xff]
    %v1280 = vld [vmem:[%s5 + $0x21c] sm:$0xff]
    %v1281 = vld [vmem:[%s5 + $0x224] sm:$0xff]
    %v1282 = vld [vmem:[%s5 + $0x22c] sm:$0xf]
    %v1283 = vld [vmem:[%s5 + $0x230] sm:$0xff]
    %v1284 = vld [vmem:[%s5 + $0x238] sm:$0xff]
    %v1285 = vld [vmem:[%s5 + $0x240] sm:$0xff]
    %v1286 = vld [vmem:[%s5 + $0x248] sm:$0xf]
    %v1287 = vld [vmem:[%s5 + $0x24c] sm:$0xff]
    %v1288 = vld [vmem:[%s5 + $0x254] sm:$0xff]
    %v1289 = vld [vmem:[%s5 + $0x25c] sm:$0xff]
    %v1290 = vld [vmem:[%s5 + $0x264] sm:$0xf]
    %v1291 = vld [vmem:[%s5 + $0x268] sm:$0xff]
    %v1292 = vld [vmem:[%s5 + $0x270] sm:$0xff]
    %v1293 = vld [vmem:[%s5 + $0x278] sm:$0xff]
    %v1294 = vld [vmem:[%s5 + $0x280] sm:$0xf]
    %v1295 = vld [vmem:[%s5 + $0x284] sm:$0xff]
    %v1296 = vld [vmem:[%s5 + $0x28c] sm:$0xff]
    %v1297 = vld [vmem:[%s5 + $0x294] sm:$0xff]
    %v1298 = vld [vmem:[%s5 + $0x29c] sm:$0xf]
    %v1299 = vld [vmem:[%s5 + $0x2a0] sm:$0xff]
    %v1300 = vld [vmem:[%s5 + $0x2a8] sm:$0xff]
    %v1301 = vld [vmem:[%s5 + $0x2b0] sm:$0xff]
    %v1302 = vld [vmem:[%s5 + $0x2b8] sm:$0xf]
    %v1303 = vld [vmem:[%s5 + $0x2bc] sm:$0xff]
    %v1304 = vld [vmem:[%s5 + $0x2c4] sm:$0xff]
    %v1305 = vld [vmem:[%s5 + $0x2cc] sm:$0xff]
    %v1306 = vld [vmem:[%s5 + $0x2d4] sm:$0xf]
    %v1307 = vld [vmem:[%s5 + $0x2d8] sm:$0xff]
    %v1308 = vld [vmem:[%s5 + $0x2e0] sm:$0xff]
    %v1309 = vld [vmem:[%s5 + $0x2e8] sm:$0xff]
    %v1310 = vld [vmem:[%s5 + $0x2f0] sm:$0xf]
    %v1311 = vld [vmem:[%s5 + $0x2f4] sm:$0xff]
    %v1312 = vld [vmem:[%s5 + $0x2fc] sm:$0xff]
    %v1313 = vld [vmem:[%s5 + $0x304] sm:$0xff]
    %v1314 = vld [vmem:[%s5 + $0x30c] sm:$0xf]
    %v1315 = vld [vmem:[%s5 + $0x310] sm:$0xff]
    %v1316 = vld [vmem:[%s5 + $0x318] sm:$0xff]
    %v1317 = vld [vmem:[%s5 + $0x320] sm:$0xff]
    %v1318 = vld [vmem:[%s5 + $0x328] sm:$0xf]
    %v1319 = vld [vmem:[%s5 + $0x32c] sm:$0xff]
    %v1320 = vld [vmem:[%s5 + $0x334] sm:$0xff]
    %v1321 = vld [vmem:[%s5 + $0x33c] sm:$0xff]
    %v1322 = vld [vmem:[%s5 + $0x344] sm:$0xf]
    %v1323 = vld [vmem:[%s5 + $0x348] sm:$0xff]
    %v1324 = vld [vmem:[%s5 + $0x350] sm:$0xff]
    %v1325 = vld [vmem:[%s5 + $0x358] sm:$0xff]
    %v1326 = vld [vmem:[%s5 + $0x360] sm:$0xf]
    %v1327 = vld [vmem:[%s5 + $0x364] sm:$0xff]
    %v1328 = vld [vmem:[%s5 + $0x36c] sm:$0xff]
    %v1329 = vld [vmem:[%s5 + $0x374] sm:$0xff]
    %v1330 = vld [vmem:[%s5 + $0x37c] sm:$0xf]
    %v1331 = vld [vmem:[%s5 + $0x380] sm:$0xff]
    %v1332 = vld [vmem:[%s5 + $0x388] sm:$0xff]
    %v1333 = vld [vmem:[%s5 + $0x390] sm:$0xff]
    %v1334 = vld [vmem:[%s5 + $0x398] sm:$0xf]
    %v1335 = vld [vmem:[%s5 + $0x39c] sm:$0xff]
    %v1336 = vld [vmem:[%s5 + $0x3a4] sm:$0xff]
    %v1337 = vld [vmem:[%s5 + $0x3ac] sm:$0xff]
    %v1338 = vld [vmem:[%s5 + $0x3b4] sm:$0xf]
    %v1339 = vld [vmem:[%s5 + $0x3b8] sm:$0xff]
    %v1340 = vld [vmem:[%s5 + $0x3c0] sm:$0xff]
    %v1341 = vld [vmem:[%s5 + $0x3c8] sm:$0xff]
    %v1342 = vld [vmem:[%s5 + $0x3d0] sm:$0xf]
    %v1343 = vld [vmem:[%s5 + $0x3d4] sm:$0xff]
    %v1344 = vld [vmem:[%s5 + $0x3dc] sm:$0xff]
    %v1345 = vld [vmem:[%s5 + $0x3e4] sm:$0xff]
    %v1346 = vld [vmem:[%s5 + $0x3ec] sm:$0xf]
    %v1347 = vld [vmem:[%s5 + $0x3f0] sm:$0xff]
    %v1348 = vld [vmem:[%s5 + $0x3f8] sm:$0xff]
    %v1349 = vld [vmem:[%s5 + $0x400] sm:$0xff]
    %v1350 = vld [vmem:[%s5 + $0x408] sm:$0xf]
    %v1351 = vld [vmem:[%s5 + $0x40c] sm:$0xff]
    %v1352 = vld [vmem:[%s5 + $0x414] sm:$0xff]
    %v1353 = vld [vmem:[%s5 + $0x41c] sm:$0xff]
    %v1354 = vld [vmem:[%s5 + $0x424] sm:$0xf]
    %v1355 = vld [vmem:[%s5 + $0x428] sm:$0xff]
    %v1356 = vld [vmem:[%s5 + $0x430] sm:$0xff]
    %v1357 = vld [vmem:[%s5 + $0x438] sm:$0xff]
    %v1358 = vld [vmem:[%s5 + $0x440] sm:$0xf]
    %v1359 = vld [vmem:[%s5 + $0x444] sm:$0xff]
    %v1360 = vld [vmem:[%s5 + $0x44c] sm:$0xff]
    %v1361 = vld [vmem:[%s5 + $0x454] sm:$0xff]
    %v1362 = vld [vmem:[%s5 + $0x45c] sm:$0xf]
    %v1363 = vld [vmem:[%s5 + $0x460] sm:$0xff]
    %v1364 = vld [vmem:[%s5 + $0x468] sm:$0xff]
    %v1365 = vld [vmem:[%s5 + $0x470] sm:$0xff]
    %v1366 = vld [vmem:[%s5 + $0x478] sm:$0xf]
    %v1367 = vld [vmem:[%s5 + $0x47c] sm:$0xff]
    %v1368 = vld [vmem:[%s5 + $0x484] sm:$0xff]
    %v1369 = vld [vmem:[%s5 + $0x48c] sm:$0xff]
    %v1370 = vld [vmem:[%s5 + $0x494] sm:$0xf]
    %v1371 = vld [vmem:[%s5 + $0x498] sm:$0xff]
    %v1372 = vld [vmem:[%s5 + $0x4a0] sm:$0xff]
    %v1373 = vld [vmem:[%s5 + $0x4a8] sm:$0xff]
    %v1374 = vld [vmem:[%s5 + $0x4b0] sm:$0xf]
    %v1375 = vld [vmem:[%s5 + $0x4b4] sm:$0xff]
    %v1376 = vld [vmem:[%s5 + $0x4bc] sm:$0xff]
    %v1377 = vld [vmem:[%s5 + $0x4c4] sm:$0xff]
    %v1378 = vld [vmem:[%s5 + $0x4cc] sm:$0xf]
    %v1379 = vld [vmem:[%s5 + $0x4d0] sm:$0xff]
    %v1380 = vld [vmem:[%s5 + $0x4d8] sm:$0xff]
    %v1381 = vld [vmem:[%s5 + $0x4e0] sm:$0xff]
    %v1382 = vld [vmem:[%s5 + $0x4e8] sm:$0xf]
    %v1383 = vld [vmem:[%s5 + $0x4ec] sm:$0xff]
    %v1384 = vld [vmem:[%s5 + $0x4f4] sm:$0xff]
    %v1385 = vld [vmem:[%s5 + $0x4fc] sm:$0xff]
    %v1386 = vld [vmem:[%s5 + $0x504] sm:$0xf]
    %v1387 = vld [vmem:[%s5 + $0x508] sm:$0xff]
    %v1388 = vld [vmem:[%s5 + $0x510] sm:$0xff]
    %v1389 = vld [vmem:[%s5 + $0x518] sm:$0xff]
    %v1390 = vld [vmem:[%s5 + $0x520] sm:$0xf]
    %v1391 = vld [vmem:[%s5 + $0x524] sm:$0xff]
    %v1392 = vld [vmem:[%s5 + $0x52c] sm:$0xff]
    %v1393 = vld [vmem:[%s5 + $0x534] sm:$0xff]
    %v1394 = vld [vmem:[%s5 + $0x53c] sm:$0xf]
    %v1395 = vld [vmem:[%s5 + $0x540] sm:$0xff]
    %v1396 = vld [vmem:[%s5 + $0x548] sm:$0xff]
    %v1397 = vld [vmem:[%s5 + $0x550] sm:$0xff]
    %v1398 = vld [vmem:[%s5 + $0x558] sm:$0xf]
    %v1399 = vld [vmem:[%s5 + $0x55c] sm:$0xff]
    %v1400 = vld [vmem:[%s5 + $0x564] sm:$0xff]
    %v1401 = vld [vmem:[%s5 + $0x56c] sm:$0xff]
    %v1402 = vld [vmem:[%s5 + $0x574] sm:$0xf]
    %v1403 = vld [vmem:[%s5 + $0x578] sm:$0xff]
    %v1404 = vld [vmem:[%s5 + $0x580] sm:$0xff]
    %v1405 = vld [vmem:[%s5 + $0x588] sm:$0xff]
    %v1406 = vld [vmem:[%s5 + $0x590] sm:$0xf]
    %v1407 = vld [vmem:[%s5 + $0x594] sm:$0xff]
    %v1408 = vld [vmem:[%s5 + $0x59c] sm:$0xff]
    %v1409 = vld [vmem:[%s5 + $0x5a4] sm:$0xff]
    %v1410 = vld [vmem:[%s5 + $0x5ac] sm:$0xf]
    %v1411 = vld [vmem:[%s5 + $0x5b0] sm:$0xff]
    %v1412 = vld [vmem:[%s5 + $0x5b8] sm:$0xff]
    %v1413 = vld [vmem:[%s5 + $0x5c0] sm:$0xff]
    %v1414 = vld [vmem:[%s5 + $0x5c8] sm:$0xf]
    %v1415 = vld [vmem:[%s5 + $0x5cc] sm:$0xff]
    %v1416 = vld [vmem:[%s5 + $0x5d4] sm:$0xff]
    %v1417 = vld [vmem:[%s5 + $0x5dc] sm:$0xff]
    %v1418 = vld [vmem:[%s5 + $0x5e4] sm:$0xf]
    %v1419 = vld [vmem:[%s5 + $0x5e8] sm:$0xff]
    %v1420 = vld [vmem:[%s5 + $0x5f0] sm:$0xff]
    %v1421 = vld [vmem:[%s5 + $0x5f8] sm:$0xff]
    %v1422 = vld [vmem:[%s5 + $0x600] sm:$0xf]
    %v1423 = vld [vmem:[%s5 + $0x604] sm:$0xff]
    %v1424 = vld [vmem:[%s5 + $0x60c] sm:$0xff]
    %v1425 = vld [vmem:[%s5 + $0x614] sm:$0xff]
    %v1426 = vld [vmem:[%s5 + $0x61c] sm:$0xf]
    %v1427 = vld [vmem:[%s5 + $0x620] sm:$0xff]
    %v1428 = vld [vmem:[%s5 + $0x628] sm:$0xff]
    %v1429 = vld [vmem:[%s5 + $0x630] sm:$0xff]
    %v1430 = vld [vmem:[%s5 + $0x638] sm:$0xf]
    %v1431 = vld [vmem:[%s5 + $0x63c] sm:$0xff]
    %v1432 = vld [vmem:[%s5 + $0x644] sm:$0xff]
    %v1433 = vld [vmem:[%s5 + $0x64c] sm:$0xff]
    %v1434 = vld [vmem:[%s5 + $0x654] sm:$0xf]
    %v1435 = vld [vmem:[%s5 + $0x658] sm:$0xff]
    %v1436 = vld [vmem:[%s5 + $0x660] sm:$0xff]
    %v1437 = vld [vmem:[%s5 + $0x668] sm:$0xff]
    %v1438 = vld [vmem:[%s5 + $0x670] sm:$0xf]
    %v1439 = vld [vmem:[%s5 + $0x674] sm:$0xff]
    %v1440 = vld [vmem:[%s5 + $0x67c] sm:$0xff]
    %v1441 = vld [vmem:[%s5 + $0x684] sm:$0xff]
    %v1442 = vld [vmem:[%s5 + $0x68c] sm:$0xf]
    %v1443 = vld [vmem:[%s5 + $0x690] sm:$0xff]
    %v1444 = vld [vmem:[%s5 + $0x698] sm:$0xff]
    %v1445 = vld [vmem:[%s5 + $0x6a0] sm:$0xff]
    %v1446 = vld [vmem:[%s5 + $0x6a8] sm:$0xf]
    %v1447 = vld [vmem:[%s5 + $0x6ac] sm:$0xff]
    %v1448 = vld [vmem:[%s5 + $0x6b4] sm:$0xff]
    %v1449 = vld [vmem:[%s5 + $0x6bc] sm:$0xff]
    %v1450 = vld [vmem:[%s5 + $0x6c4] sm:$0xf]
    %v1451 = vld [vmem:[%s5 + $0x6c8] sm:$0xff]
    %v1452 = vld [vmem:[%s5 + $0x6d0] sm:$0xff]
    %v1453 = vld [vmem:[%s5 + $0x6d8] sm:$0xff]
    %v1454 = vld [vmem:[%s5 + $0x6e0] sm:$0xf]
    %v1455 = vld [vmem:[%s5 + $0x6e4] sm:$0xff]
    %v1456 = vld [vmem:[%s5 + $0x6ec] sm:$0xff]
    %v1457 = vld [vmem:[%s5 + $0x6f4] sm:$0xff]
    %v1458 = vld [vmem:[%s5 + $0x6fc] sm:$0xf]
    %v1459 = vld [vmem:[%s6] sm:$0x7f]
    %v1461 = vlaneseq
    %v1462 = vshrl.u32 %v1461, 7
    %v1463 = vsub.s32 0, %v1462
    %v1464 = vrot.slane %v1459, %v1463
    %v1465 = vlaneseq
    %v1466 = vshrl.u32 %v1465, 7
    %v1467 = vsub.s32 1, %v1466
    %v1468 = vrot.slane %v1459, %v1467
    %v1469 = vlaneseq
    %v1470 = vshrl.u32 %v1469, 7
    %v1471 = vsub.s32 2, %v1470
    %v1472 = vrot.slane %v1459, %v1471
    %v1473 = vlaneseq
    %v1474 = vshrl.u32 %v1473, 7
    %v1475 = vsub.s32 3, %v1474
    %v1476 = vrot.slane %v1459, %v1475
    %v1477 = vlaneseq
    %v1478 = vshrl.u32 %v1477, 7
    %v1479 = vsub.s32 4, %v1478
    %v1480 = vrot.slane %v1459, %v1479
    %v1481 = vlaneseq
    %v1482 = vshrl.u32 %v1481, 7
    %v1483 = vsub.s32 5, %v1482
    %v1484 = vrot.slane %v1459, %v1483
    %v1485 = vlaneseq
    %v1486 = vshrl.u32 %v1485, 7
    %v1487 = vsub.s32 6, %v1486
    %v1488 = vrot.slane %v1459, %v1487
    %v1752 = vunpack.c.l.b16 %v1203
    %v1753 = vunpack.c.h.b16 %v1203
    %v1754 = vunpack.c.l.b16 %v1204
    %v1755 = vunpack.c.h.b16 %v1204
    %v1756 = vunpack.c.l.b16 %v1205
    %v1757 = vunpack.c.h.b16 %v1205
    %v1758 = vunpack.c.l.b16 %v1206
    %v1759 = vunpack.c.l.b16 %v1207
    %v1760 = vunpack.c.h.b16 %v1207
    %v1761 = vunpack.c.l.b16 %v1208
    %v1762 = vunpack.c.h.b16 %v1208
    %v1763 = vunpack.c.l.b16 %v1209
    %v1764 = vunpack.c.h.b16 %v1209
    %v1765 = vunpack.c.l.b16 %v1210
    %v1766 = vunpack.c.l.b16 %v1211
    %v1767 = vunpack.c.h.b16 %v1211
    %v1768 = vunpack.c.l.b16 %v1212
    %v1769 = vunpack.c.h.b16 %v1212
    %v1770 = vunpack.c.l.b16 %v1213
    %v1771 = vunpack.c.h.b16 %v1213
    %v1772 = vunpack.c.l.b16 %v1214
    %v1773 = vunpack.c.l.b16 %v1215
    %v1774 = vunpack.c.h.b16 %v1215
    %v1775 = vunpack.c.l.b16 %v1216
    %v1776 = vunpack.c.h.b16 %v1216
    %v1777 = vunpack.c.l.b16 %v1217
    %v1778 = vunpack.c.h.b16 %v1217
    %v1779 = vunpack.c.l.b16 %v1218
    %v1780 = vunpack.c.l.b16 %v1219
    %v1781 = vunpack.c.h.b16 %v1219
    %v1782 = vunpack.c.l.b16 %v1220
    %v1783 = vunpack.c.h.b16 %v1220
    %v1784 = vunpack.c.l.b16 %v1221
    %v1785 = vunpack.c.h.b16 %v1221
    %v1786 = vunpack.c.l.b16 %v1222
    %v1787 = vunpack.c.l.b16 %v1223
    %v1788 = vunpack.c.h.b16 %v1223
    %v1789 = vunpack.c.l.b16 %v1224
    %v1790 = vunpack.c.h.b16 %v1224
    %v1791 = vunpack.c.l.b16 %v1225
    %v1792 = vunpack.c.h.b16 %v1225
    %v1793 = vunpack.c.l.b16 %v1226
    %v1794 = vunpack.c.l.b16 %v1227
    %v1795 = vunpack.c.h.b16 %v1227
    %v1796 = vunpack.c.l.b16 %v1228
    %v1797 = vunpack.c.h.b16 %v1228
    %v1798 = vunpack.c.l.b16 %v1229
    %v1799 = vunpack.c.h.b16 %v1229
    %v1800 = vunpack.c.l.b16 %v1230
    %v1801 = vunpack.c.l.b16 %v1231
    %v1802 = vunpack.c.h.b16 %v1231
    %v1803 = vunpack.c.l.b16 %v1232
    %v1804 = vunpack.c.h.b16 %v1232
    %v1805 = vunpack.c.l.b16 %v1233
    %v1806 = vunpack.c.h.b16 %v1233
    %v1807 = vunpack.c.l.b16 %v1234
    %v1808 = vunpack.c.l.b16 %v1235
    %v1809 = vunpack.c.h.b16 %v1235
    %v1810 = vunpack.c.l.b16 %v1236
    %v1811 = vunpack.c.h.b16 %v1236
    %v1812 = vunpack.c.l.b16 %v1237
    %v1813 = vunpack.c.h.b16 %v1237
    %v1814 = vunpack.c.l.b16 %v1238
    %v1815 = vunpack.c.l.b16 %v1239
    %v1816 = vunpack.c.h.b16 %v1239
    %v1817 = vunpack.c.l.b16 %v1240
    %v1818 = vunpack.c.h.b16 %v1240
    %v1819 = vunpack.c.l.b16 %v1241
    %v1820 = vunpack.c.h.b16 %v1241
    %v1821 = vunpack.c.l.b16 %v1242
    %v1822 = vunpack.c.l.b16 %v1243
    %v1823 = vunpack.c.h.b16 %v1243
    %v1824 = vunpack.c.l.b16 %v1244
    %v1825 = vunpack.c.h.b16 %v1244
    %v1826 = vunpack.c.l.b16 %v1245
    %v1827 = vunpack.c.h.b16 %v1245
    %v1828 = vunpack.c.l.b16 %v1246
    %v1829 = vunpack.c.l.b16 %v1247
    %v1830 = vunpack.c.h.b16 %v1247
    %v1831 = vunpack.c.l.b16 %v1248
    %v1832 = vunpack.c.h.b16 %v1248
    %v1833 = vunpack.c.l.b16 %v1249
    %v1834 = vunpack.c.h.b16 %v1249
    %v1835 = vunpack.c.l.b16 %v1250
    %v1836 = vunpack.c.l.b16 %v1251
    %v1837 = vunpack.c.h.b16 %v1251
    %v1838 = vunpack.c.l.b16 %v1252
    %v1839 = vunpack.c.h.b16 %v1252
    %v1840 = vunpack.c.l.b16 %v1253
    %v1841 = vunpack.c.h.b16 %v1253
    %v1842 = vunpack.c.l.b16 %v1254
    %v1843 = vunpack.c.l.b16 %v1255
    %v1844 = vunpack.c.h.b16 %v1255
    %v1845 = vunpack.c.l.b16 %v1256
    %v1846 = vunpack.c.h.b16 %v1256
    %v1847 = vunpack.c.l.b16 %v1257
    %v1848 = vunpack.c.h.b16 %v1257
    %v1849 = vunpack.c.l.b16 %v1258
    %v1850 = vunpack.c.l.b16 %v1259
    %v1851 = vunpack.c.h.b16 %v1259
    %v1852 = vunpack.c.l.b16 %v1260
    %v1853 = vunpack.c.h.b16 %v1260
    %v1854 = vunpack.c.l.b16 %v1261
    %v1855 = vunpack.c.h.b16 %v1261
    %v1856 = vunpack.c.l.b16 %v1262
    %v1857 = vunpack.c.l.b16 %v1263
    %v1858 = vunpack.c.h.b16 %v1263
    %v1859 = vunpack.c.l.b16 %v1264
    %v1860 = vunpack.c.h.b16 %v1264
    %v1861 = vunpack.c.l.b16 %v1265
    %v1862 = vunpack.c.h.b16 %v1265
    %v1863 = vunpack.c.l.b16 %v1266
    %v1864 = vunpack.c.l.b16 %v1267
    %v1865 = vunpack.c.h.b16 %v1267
    %v1866 = vunpack.c.l.b16 %v1268
    %v1867 = vunpack.c.h.b16 %v1268
    %v1868 = vunpack.c.l.b16 %v1269
    %v1869 = vunpack.c.h.b16 %v1269
    %v1870 = vunpack.c.l.b16 %v1270
    %v1871 = vunpack.c.l.b16 %v1271
    %v1872 = vunpack.c.h.b16 %v1271
    %v1873 = vunpack.c.l.b16 %v1272
    %v1874 = vunpack.c.h.b16 %v1272
    %v1875 = vunpack.c.l.b16 %v1273
    %v1876 = vunpack.c.h.b16 %v1273
    %v1877 = vunpack.c.l.b16 %v1274
    %v1878 = vunpack.c.l.b16 %v1275
    %v1879 = vunpack.c.h.b16 %v1275
    %v1880 = vunpack.c.l.b16 %v1276
    %v1881 = vunpack.c.h.b16 %v1276
    %v1882 = vunpack.c.l.b16 %v1277
    %v1883 = vunpack.c.h.b16 %v1277
    %v1884 = vunpack.c.l.b16 %v1278
    %v1885 = vunpack.c.l.b16 %v1279
    %v1886 = vunpack.c.h.b16 %v1279
    %v1887 = vunpack.c.l.b16 %v1280
    %v1888 = vunpack.c.h.b16 %v1280
    %v1889 = vunpack.c.l.b16 %v1281
    %v1890 = vunpack.c.h.b16 %v1281
    %v1891 = vunpack.c.l.b16 %v1282
    %v1892 = vunpack.c.l.b16 %v1283
    %v1893 = vunpack.c.h.b16 %v1283
    %v1894 = vunpack.c.l.b16 %v1284
    %v1895 = vunpack.c.h.b16 %v1284
    %v1896 = vunpack.c.l.b16 %v1285
    %v1897 = vunpack.c.h.b16 %v1285
    %v1898 = vunpack.c.l.b16 %v1286
    %v1899 = vunpack.c.l.b16 %v1287
    %v1900 = vunpack.c.h.b16 %v1287
    %v1901 = vunpack.c.l.b16 %v1288
    %v1902 = vunpack.c.h.b16 %v1288
    %v1903 = vunpack.c.l.b16 %v1289
    %v1904 = vunpack.c.h.b16 %v1289
    %v1905 = vunpack.c.l.b16 %v1290
    %v1906 = vunpack.c.l.b16 %v1291
    %v1907 = vunpack.c.h.b16 %v1291
    %v1908 = vunpack.c.l.b16 %v1292
    %v1909 = vunpack.c.h.b16 %v1292
    %v1910 = vunpack.c.l.b16 %v1293
    %v1911 = vunpack.c.h.b16 %v1293
    %v1912 = vunpack.c.l.b16 %v1294
    %v1913 = vunpack.c.l.b16 %v1295
    %v1914 = vunpack.c.h.b16 %v1295
    %v1915 = vunpack.c.l.b16 %v1296
    %v1916 = vunpack.c.h.b16 %v1296
    %v1917 = vunpack.c.l.b16 %v1297
    %v1918 = vunpack.c.h.b16 %v1297
    %v1919 = vunpack.c.l.b16 %v1298
    %v1920 = vunpack.c.l.b16 %v1299
    %v1921 = vunpack.c.h.b16 %v1299
    %v1922 = vunpack.c.l.b16 %v1300
    %v1923 = vunpack.c.h.b16 %v1300
    %v1924 = vunpack.c.l.b16 %v1301
    %v1925 = vunpack.c.h.b16 %v1301
    %v1926 = vunpack.c.l.b16 %v1302
    %v1927 = vunpack.c.l.b16 %v1303
    %v1928 = vunpack.c.h.b16 %v1303
    %v1929 = vunpack.c.l.b16 %v1304
    %v1930 = vunpack.c.h.b16 %v1304
    %v1931 = vunpack.c.l.b16 %v1305
    %v1932 = vunpack.c.h.b16 %v1305
    %v1933 = vunpack.c.l.b16 %v1306
    %v1934 = vunpack.c.l.b16 %v1307
    %v1935 = vunpack.c.h.b16 %v1307
    %v1936 = vunpack.c.l.b16 %v1308
    %v1937 = vunpack.c.h.b16 %v1308
    %v1938 = vunpack.c.l.b16 %v1309
    %v1939 = vunpack.c.h.b16 %v1309
    %v1940 = vunpack.c.l.b16 %v1310
    %v1941 = vunpack.c.l.b16 %v1311
    %v1942 = vunpack.c.h.b16 %v1311
    %v1943 = vunpack.c.l.b16 %v1312
    %v1944 = vunpack.c.h.b16 %v1312
    %v1945 = vunpack.c.l.b16 %v1313
    %v1946 = vunpack.c.h.b16 %v1313
    %v1947 = vunpack.c.l.b16 %v1314
    %v1948 = vunpack.c.l.b16 %v1315
    %v1949 = vunpack.c.h.b16 %v1315
    %v1950 = vunpack.c.l.b16 %v1316
    %v1951 = vunpack.c.h.b16 %v1316
    %v1952 = vunpack.c.l.b16 %v1317
    %v1953 = vunpack.c.h.b16 %v1317
    %v1954 = vunpack.c.l.b16 %v1318
    %v1955 = vunpack.c.l.b16 %v1319
    %v1956 = vunpack.c.h.b16 %v1319
    %v1957 = vunpack.c.l.b16 %v1320
    %v1958 = vunpack.c.h.b16 %v1320
    %v1959 = vunpack.c.l.b16 %v1321
    %v1960 = vunpack.c.h.b16 %v1321
    %v1961 = vunpack.c.l.b16 %v1322
    %v1962 = vunpack.c.l.b16 %v1323
    %v1963 = vunpack.c.h.b16 %v1323
    %v1964 = vunpack.c.l.b16 %v1324
    %v1965 = vunpack.c.h.b16 %v1324
    %v1966 = vunpack.c.l.b16 %v1325
    %v1967 = vunpack.c.h.b16 %v1325
    %v1968 = vunpack.c.l.b16 %v1326
    %v1969 = vunpack.c.l.b16 %v1327
    %v1970 = vunpack.c.h.b16 %v1327
    %v1971 = vunpack.c.l.b16 %v1328
    %v1972 = vunpack.c.h.b16 %v1328
    %v1973 = vunpack.c.l.b16 %v1329
    %v1974 = vunpack.c.h.b16 %v1329
    %v1975 = vunpack.c.l.b16 %v1330
    %v1976 = vunpack.c.l.b16 %v1331
    %v1977 = vunpack.c.h.b16 %v1331
    %v1978 = vunpack.c.l.b16 %v1332
    %v1979 = vunpack.c.h.b16 %v1332
    %v1980 = vunpack.c.l.b16 %v1333
    %v1981 = vunpack.c.h.b16 %v1333
    %v1982 = vunpack.c.l.b16 %v1334
    %v1983 = vunpack.c.l.b16 %v1335
    %v1984 = vunpack.c.h.b16 %v1335
    %v1985 = vunpack.c.l.b16 %v1336
    %v1986 = vunpack.c.h.b16 %v1336
    %v1987 = vunpack.c.l.b16 %v1337
    %v1988 = vunpack.c.h.b16 %v1337
    %v1989 = vunpack.c.l.b16 %v1338
    %v1990 = vunpack.c.l.b16 %v1339
    %v1991 = vunpack.c.h.b16 %v1339
    %v1992 = vunpack.c.l.b16 %v1340
    %v1993 = vunpack.c.h.b16 %v1340
    %v1994 = vunpack.c.l.b16 %v1341
    %v1995 = vunpack.c.h.b16 %v1341
    %v1996 = vunpack.c.l.b16 %v1342
    %v1997 = vunpack.c.l.b16 %v1343
    %v1998 = vunpack.c.h.b16 %v1343
    %v1999 = vunpack.c.l.b16 %v1344
    %v2000 = vunpack.c.h.b16 %v1344
    %v2001 = vunpack.c.l.b16 %v1345
    %v2002 = vunpack.c.h.b16 %v1345
    %v2003 = vunpack.c.l.b16 %v1346
    %v2004 = vunpack.c.l.b16 %v1347
    %v2005 = vunpack.c.h.b16 %v1347
    %v2006 = vunpack.c.l.b16 %v1348
    %v2007 = vunpack.c.h.b16 %v1348
    %v2008 = vunpack.c.l.b16 %v1349
    %v2009 = vunpack.c.h.b16 %v1349
    %v2010 = vunpack.c.l.b16 %v1350
    %v2011 = vunpack.c.l.b16 %v1351
    %v2012 = vunpack.c.h.b16 %v1351
    %v2013 = vunpack.c.l.b16 %v1352
    %v2014 = vunpack.c.h.b16 %v1352
    %v2015 = vunpack.c.l.b16 %v1353
    %v2016 = vunpack.c.h.b16 %v1353
    %v2017 = vunpack.c.l.b16 %v1354
    %v2018 = vunpack.c.l.b16 %v1355
    %v2019 = vunpack.c.h.b16 %v1355
    %v2020 = vunpack.c.l.b16 %v1356
    %v2021 = vunpack.c.h.b16 %v1356
    %v2022 = vunpack.c.l.b16 %v1357
    %v2023 = vunpack.c.h.b16 %v1357
    %v2024 = vunpack.c.l.b16 %v1358
    %v2025 = vunpack.c.l.b16 %v1359
    %v2026 = vunpack.c.h.b16 %v1359
    %v2027 = vunpack.c.l.b16 %v1360
    %v2028 = vunpack.c.h.b16 %v1360
    %v2029 = vunpack.c.l.b16 %v1361
    %v2030 = vunpack.c.h.b16 %v1361
    %v2031 = vunpack.c.l.b16 %v1362
    %v2032 = vunpack.c.l.b16 %v1363
    %v2033 = vunpack.c.h.b16 %v1363
    %v2034 = vunpack.c.l.b16 %v1364
    %v2035 = vunpack.c.h.b16 %v1364
    %v2036 = vunpack.c.l.b16 %v1365
    %v2037 = vunpack.c.h.b16 %v1365
    %v2038 = vunpack.c.l.b16 %v1366
    %v2039 = vunpack.c.l.b16 %v1367
    %v2040 = vunpack.c.h.b16 %v1367
    %v2041 = vunpack.c.l.b16 %v1368
    %v2042 = vunpack.c.h.b16 %v1368
    %v2043 = vunpack.c.l.b16 %v1369
    %v2044 = vunpack.c.h.b16 %v1369
    %v2045 = vunpack.c.l.b16 %v1370
    %v2046 = vunpack.c.l.b16 %v1371
    %v2047 = vunpack.c.h.b16 %v1371
    %v2048 = vunpack.c.l.b16 %v1372
    %v2049 = vunpack.c.h.b16 %v1372
    %v2050 = vunpack.c.l.b16 %v1373
    %v2051 = vunpack.c.h.b16 %v1373
    %v2052 = vunpack.c.l.b16 %v1374
    %v2053 = vunpack.c.l.b16 %v1375
    %v2054 = vunpack.c.h.b16 %v1375
    %v2055 = vunpack.c.l.b16 %v1376
    %v2056 = vunpack.c.h.b16 %v1376
    %v2057 = vunpack.c.l.b16 %v1377
    %v2058 = vunpack.c.h.b16 %v1377
    %v2059 = vunpack.c.l.b16 %v1378
    %v2060 = vunpack.c.l.b16 %v1379
    %v2061 = vunpack.c.h.b16 %v1379
    %v2062 = vunpack.c.l.b16 %v1380
    %v2063 = vunpack.c.h.b16 %v1380
    %v2064 = vunpack.c.l.b16 %v1381
    %v2065 = vunpack.c.h.b16 %v1381
    %v2066 = vunpack.c.l.b16 %v1382
    %v2067 = vunpack.c.l.b16 %v1383
    %v2068 = vunpack.c.h.b16 %v1383
    %v2069 = vunpack.c.l.b16 %v1384
    %v2070 = vunpack.c.h.b16 %v1384
    %v2071 = vunpack.c.l.b16 %v1385
    %v2072 = vunpack.c.h.b16 %v1385
    %v2073 = vunpack.c.l.b16 %v1386
    %v2074 = vunpack.c.l.b16 %v1387
    %v2075 = vunpack.c.h.b16 %v1387
    %v2076 = vunpack.c.l.b16 %v1388
    %v2077 = vunpack.c.h.b16 %v1388
    %v2078 = vunpack.c.l.b16 %v1389
    %v2079 = vunpack.c.h.b16 %v1389
    %v2080 = vunpack.c.l.b16 %v1390
    %v2081 = vunpack.c.l.b16 %v1391
    %v2082 = vunpack.c.h.b16 %v1391
    %v2083 = vunpack.c.l.b16 %v1392
    %v2084 = vunpack.c.h.b16 %v1392
    %v2085 = vunpack.c.l.b16 %v1393
    %v2086 = vunpack.c.h.b16 %v1393
    %v2087 = vunpack.c.l.b16 %v1394
    %v2088 = vunpack.c.l.b16 %v1395
    %v2089 = vunpack.c.h.b16 %v1395
    %v2090 = vunpack.c.l.b16 %v1396
    %v2091 = vunpack.c.h.b16 %v1396
    %v2092 = vunpack.c.l.b16 %v1397
    %v2093 = vunpack.c.h.b16 %v1397
    %v2094 = vunpack.c.l.b16 %v1398
    %v2095 = vunpack.c.l.b16 %v1399
    %v2096 = vunpack.c.h.b16 %v1399
    %v2097 = vunpack.c.l.b16 %v1400
    %v2098 = vunpack.c.h.b16 %v1400
    %v2099 = vunpack.c.l.b16 %v1401
    %v2100 = vunpack.c.h.b16 %v1401
    %v2101 = vunpack.c.l.b16 %v1402
    %v2102 = vunpack.c.l.b16 %v1403
    %v2103 = vunpack.c.h.b16 %v1403
    %v2104 = vunpack.c.l.b16 %v1404
    %v2105 = vunpack.c.h.b16 %v1404
    %v2106 = vunpack.c.l.b16 %v1405
    %v2107 = vunpack.c.h.b16 %v1405
    %v2108 = vunpack.c.l.b16 %v1406
    %v2109 = vunpack.c.l.b16 %v1407
    %v2110 = vunpack.c.h.b16 %v1407
    %v2111 = vunpack.c.l.b16 %v1408
    %v2112 = vunpack.c.h.b16 %v1408
    %v2113 = vunpack.c.l.b16 %v1409
    %v2114 = vunpack.c.h.b16 %v1409
    %v2115 = vunpack.c.l.b16 %v1410
    %v2116 = vunpack.c.l.b16 %v1411
    %v2117 = vunpack.c.h.b16 %v1411
    %v2118 = vunpack.c.l.b16 %v1412
    %v2119 = vunpack.c.h.b16 %v1412
    %v2120 = vunpack.c.l.b16 %v1413
    %v2121 = vunpack.c.h.b16 %v1413
    %v2122 = vunpack.c.l.b16 %v1414
    %v2123 = vunpack.c.l.b16 %v1415
    %v2124 = vunpack.c.h.b16 %v1415
    %v2125 = vunpack.c.l.b16 %v1416
    %v2126 = vunpack.c.h.b16 %v1416
    %v2127 = vunpack.c.l.b16 %v1417
    %v2128 = vunpack.c.h.b16 %v1417
    %v2129 = vunpack.c.l.b16 %v1418
    %v2130 = vunpack.c.l.b16 %v1419
    %v2131 = vunpack.c.h.b16 %v1419
    %v2132 = vunpack.c.l.b16 %v1420
    %v2133 = vunpack.c.h.b16 %v1420
    %v2134 = vunpack.c.l.b16 %v1421
    %v2135 = vunpack.c.h.b16 %v1421
    %v2136 = vunpack.c.l.b16 %v1422
    %v2137 = vunpack.c.l.b16 %v1423
    %v2138 = vunpack.c.h.b16 %v1423
    %v2139 = vunpack.c.l.b16 %v1424
    %v2140 = vunpack.c.h.b16 %v1424
    %v2141 = vunpack.c.l.b16 %v1425
    %v2142 = vunpack.c.h.b16 %v1425
    %v2143 = vunpack.c.l.b16 %v1426
    %v2144 = vunpack.c.l.b16 %v1427
    %v2145 = vunpack.c.h.b16 %v1427
    %v2146 = vunpack.c.l.b16 %v1428
    %v2147 = vunpack.c.h.b16 %v1428
    %v2148 = vunpack.c.l.b16 %v1429
    %v2149 = vunpack.c.h.b16 %v1429
    %v2150 = vunpack.c.l.b16 %v1430
    %v2151 = vunpack.c.l.b16 %v1431
    %v2152 = vunpack.c.h.b16 %v1431
    %v2153 = vunpack.c.l.b16 %v1432
    %v2154 = vunpack.c.h.b16 %v1432
    %v2155 = vunpack.c.l.b16 %v1433
    %v2156 = vunpack.c.h.b16 %v1433
    %v2157 = vunpack.c.l.b16 %v1434
    %v2158 = vunpack.c.l.b16 %v1435
    %v2159 = vunpack.c.h.b16 %v1435
    %v2160 = vunpack.c.l.b16 %v1436
    %v2161 = vunpack.c.h.b16 %v1436
    %v2162 = vunpack.c.l.b16 %v1437
    %v2163 = vunpack.c.h.b16 %v1437
    %v2164 = vunpack.c.l.b16 %v1438
    %v2165 = vunpack.c.l.b16 %v1439
    %v2166 = vunpack.c.h.b16 %v1439
    %v2167 = vunpack.c.l.b16 %v1440
    %v2168 = vunpack.c.h.b16 %v1440
    %v2169 = vunpack.c.l.b16 %v1441
    %v2170 = vunpack.c.h.b16 %v1441
    %v2171 = vunpack.c.l.b16 %v1442
    %v2172 = vunpack.c.l.b16 %v1443
    %v2173 = vunpack.c.h.b16 %v1443
    %v2174 = vunpack.c.l.b16 %v1444
    %v2175 = vunpack.c.h.b16 %v1444
    %v2176 = vunpack.c.l.b16 %v1445
    %v2177 = vunpack.c.h.b16 %v1445
    %v2178 = vunpack.c.l.b16 %v1446
    %v2179 = vunpack.c.l.b16 %v1447
    %v2180 = vunpack.c.h.b16 %v1447
    %v2181 = vunpack.c.l.b16 %v1448
    %v2182 = vunpack.c.h.b16 %v1448
    %v2183 = vunpack.c.l.b16 %v1449
    %v2184 = vunpack.c.h.b16 %v1449
    %v2185 = vunpack.c.l.b16 %v1450
    %v2186 = vunpack.c.l.b16 %v1451
    %v2187 = vunpack.c.h.b16 %v1451
    %v2188 = vunpack.c.l.b16 %v1452
    %v2189 = vunpack.c.h.b16 %v1452
    %v2190 = vunpack.c.l.b16 %v1453
    %v2191 = vunpack.c.h.b16 %v1453
    %v2192 = vunpack.c.l.b16 %v1454
    %v2193 = vunpack.c.l.b16 %v1455
    %v2194 = vunpack.c.h.b16 %v1455
    %v2195 = vunpack.c.l.b16 %v1456
    %v2196 = vunpack.c.h.b16 %v1456
    %v2197 = vunpack.c.l.b16 %v1457
    %v2198 = vunpack.c.h.b16 %v1457
    %v2199 = vunpack.c.l.b16 %v1458
    %v2200 = vpack.c.b16 %v1759, %v1752
    %v2201 = vpack.c.b16 %v1760, %v1753
    %v2202 = vpack.c.b16 %v1761, %v1754
    %v2203 = vpack.c.b16 %v1762, %v1755
    %v2204 = vpack.c.b16 %v1763, %v1756
    %v2205 = vpack.c.b16 %v1764, %v1757
    %v2206 = vpack.c.b16 %v1765, %v1758
    %v2207 = vpack.c.b16 %v1773, %v1766
    %v2208 = vpack.c.b16 %v1774, %v1767
    %v2209 = vpack.c.b16 %v1775, %v1768
    %v2210 = vpack.c.b16 %v1776, %v1769
    %v2211 = vpack.c.b16 %v1777, %v1770
    %v2212 = vpack.c.b16 %v1778, %v1771
    %v2213 = vpack.c.b16 %v1779, %v1772
    %v2214 = vpack.c.b16 %v1787, %v1780
    %v2215 = vpack.c.b16 %v1788, %v1781
    %v2216 = vpack.c.b16 %v1789, %v1782
    %v2217 = vpack.c.b16 %v1790, %v1783
    %v2218 = vpack.c.b16 %v1791, %v1784
    %v2219 = vpack.c.b16 %v1792, %v1785
    %v2220 = vpack.c.b16 %v1793, %v1786
    %v2221 = vpack.c.b16 %v1801, %v1794
    %v2222 = vpack.c.b16 %v1802, %v1795
    %v2223 = vpack.c.b16 %v1803, %v1796
    %v2224 = vpack.c.b16 %v1804, %v1797
    %v2225 = vpack.c.b16 %v1805, %v1798
    %v2226 = vpack.c.b16 %v1806, %v1799
    %v2227 = vpack.c.b16 %v1807, %v1800
    %v2228 = vpack.c.b16 %v1815, %v1808
    %v2229 = vpack.c.b16 %v1816, %v1809
    %v2230 = vpack.c.b16 %v1817, %v1810
    %v2231 = vpack.c.b16 %v1818, %v1811
    %v2232 = vpack.c.b16 %v1819, %v1812
    %v2233 = vpack.c.b16 %v1820, %v1813
    %v2234 = vpack.c.b16 %v1821, %v1814
    %v2235 = vpack.c.b16 %v1829, %v1822
    %v2236 = vpack.c.b16 %v1830, %v1823
    %v2237 = vpack.c.b16 %v1831, %v1824
    %v2238 = vpack.c.b16 %v1832, %v1825
    %v2239 = vpack.c.b16 %v1833, %v1826
    %v2240 = vpack.c.b16 %v1834, %v1827
    %v2241 = vpack.c.b16 %v1835, %v1828
    %v2242 = vpack.c.b16 %v1843, %v1836
    %v2243 = vpack.c.b16 %v1844, %v1837
    %v2244 = vpack.c.b16 %v1845, %v1838
    %v2245 = vpack.c.b16 %v1846, %v1839
    %v2246 = vpack.c.b16 %v1847, %v1840
    %v2247 = vpack.c.b16 %v1848, %v1841
    %v2248 = vpack.c.b16 %v1849, %v1842
    %v2249 = vpack.c.b16 %v1857, %v1850
    %v2250 = vpack.c.b16 %v1858, %v1851
    %v2251 = vpack.c.b16 %v1859, %v1852
    %v2252 = vpack.c.b16 %v1860, %v1853
    %v2253 = vpack.c.b16 %v1861, %v1854
    %v2254 = vpack.c.b16 %v1862, %v1855
    %v2255 = vpack.c.b16 %v1863, %v1856
    %v2256 = vpack.c.b16 %v1871, %v1864
    %v2257 = vpack.c.b16 %v1872, %v1865
    %v2258 = vpack.c.b16 %v1873, %v1866
    %v2259 = vpack.c.b16 %v1874, %v1867
    %v2260 = vpack.c.b16 %v1875, %v1868
    %v2261 = vpack.c.b16 %v1876, %v1869
    %v2262 = vpack.c.b16 %v1877, %v1870
    %v2263 = vpack.c.b16 %v1885, %v1878
    %v2264 = vpack.c.b16 %v1886, %v1879
    %v2265 = vpack.c.b16 %v1887, %v1880
    %v2266 = vpack.c.b16 %v1888, %v1881
    %v2267 = vpack.c.b16 %v1889, %v1882
    %v2268 = vpack.c.b16 %v1890, %v1883
    %v2269 = vpack.c.b16 %v1891, %v1884
    %v2270 = vpack.c.b16 %v1899, %v1892
    %v2271 = vpack.c.b16 %v1900, %v1893
    %v2272 = vpack.c.b16 %v1901, %v1894
    %v2273 = vpack.c.b16 %v1902, %v1895
    %v2274 = vpack.c.b16 %v1903, %v1896
    %v2275 = vpack.c.b16 %v1904, %v1897
    %v2276 = vpack.c.b16 %v1905, %v1898
    %v2277 = vpack.c.b16 %v1913, %v1906
    %v2278 = vpack.c.b16 %v1914, %v1907
    %v2279 = vpack.c.b16 %v1915, %v1908
    %v2280 = vpack.c.b16 %v1916, %v1909
    %v2281 = vpack.c.b16 %v1917, %v1910
    %v2282 = vpack.c.b16 %v1918, %v1911
    %v2283 = vpack.c.b16 %v1919, %v1912
    %v2284 = vpack.c.b16 %v1927, %v1920
    %v2285 = vpack.c.b16 %v1928, %v1921
    %v2286 = vpack.c.b16 %v1929, %v1922
    %v2287 = vpack.c.b16 %v1930, %v1923
    %v2288 = vpack.c.b16 %v1931, %v1924
    %v2289 = vpack.c.b16 %v1932, %v1925
    %v2290 = vpack.c.b16 %v1933, %v1926
    %v2291 = vpack.c.b16 %v1941, %v1934
    %v2292 = vpack.c.b16 %v1942, %v1935
    %v2293 = vpack.c.b16 %v1943, %v1936
    %v2294 = vpack.c.b16 %v1944, %v1937
    %v2295 = vpack.c.b16 %v1945, %v1938
    %v2296 = vpack.c.b16 %v1946, %v1939
    %v2297 = vpack.c.b16 %v1947, %v1940
    %v2298 = vpack.c.b16 %v1955, %v1948
    %v2299 = vpack.c.b16 %v1956, %v1949
    %v2300 = vpack.c.b16 %v1957, %v1950
    %v2301 = vpack.c.b16 %v1958, %v1951
    %v2302 = vpack.c.b16 %v1959, %v1952
    %v2303 = vpack.c.b16 %v1960, %v1953
    %v2304 = vpack.c.b16 %v1961, %v1954
    %v2305 = vpack.c.b16 %v1969, %v1962
    %v2306 = vpack.c.b16 %v1970, %v1963
    %v2307 = vpack.c.b16 %v1971, %v1964
    %v2308 = vpack.c.b16 %v1972, %v1965
    %v2309 = vpack.c.b16 %v1973, %v1966
    %v2310 = vpack.c.b16 %v1974, %v1967
    %v2311 = vpack.c.b16 %v1975, %v1968
    %v2312 = vpack.c.b16 %v1983, %v1976
    %v2313 = vpack.c.b16 %v1984, %v1977
    %v2314 = vpack.c.b16 %v1985, %v1978
    %v2315 = vpack.c.b16 %v1986, %v1979
    %v2316 = vpack.c.b16 %v1987, %v1980
    %v2317 = vpack.c.b16 %v1988, %v1981
    %v2318 = vpack.c.b16 %v1989, %v1982
    %v2319 = vpack.c.b16 %v1997, %v1990
    %v2320 = vpack.c.b16 %v1998, %v1991
    %v2321 = vpack.c.b16 %v1999, %v1992
    %v2322 = vpack.c.b16 %v2000, %v1993
    %v2323 = vpack.c.b16 %v2001, %v1994
    %v2324 = vpack.c.b16 %v2002, %v1995
    %v2325 = vpack.c.b16 %v2003, %v1996
    %v2326 = vpack.c.b16 %v2011, %v2004
    %v2327 = vpack.c.b16 %v2012, %v2005
    %v2328 = vpack.c.b16 %v2013, %v2006
    %v2329 = vpack.c.b16 %v2014, %v2007
    %v2330 = vpack.c.b16 %v2015, %v2008
    %v2331 = vpack.c.b16 %v2016, %v2009
    %v2332 = vpack.c.b16 %v2017, %v2010
    %v2333 = vpack.c.b16 %v2025, %v2018
    %v2334 = vpack.c.b16 %v2026, %v2019
    %v2335 = vpack.c.b16 %v2027, %v2020
    %v2336 = vpack.c.b16 %v2028, %v2021
    %v2337 = vpack.c.b16 %v2029, %v2022
    %v2338 = vpack.c.b16 %v2030, %v2023
    %v2339 = vpack.c.b16 %v2031, %v2024
    %v2340 = vpack.c.b16 %v2039, %v2032
    %v2341 = vpack.c.b16 %v2040, %v2033
    %v2342 = vpack.c.b16 %v2041, %v2034
    %v2343 = vpack.c.b16 %v2042, %v2035
    %v2344 = vpack.c.b16 %v2043, %v2036
    %v2345 = vpack.c.b16 %v2044, %v2037
    %v2346 = vpack.c.b16 %v2045, %v2038
    %v2347 = vpack.c.b16 %v2053, %v2046
    %v2348 = vpack.c.b16 %v2054, %v2047
    %v2349 = vpack.c.b16 %v2055, %v2048
    %v2350 = vpack.c.b16 %v2056, %v2049
    %v2351 = vpack.c.b16 %v2057, %v2050
    %v2352 = vpack.c.b16 %v2058, %v2051
    %v2353 = vpack.c.b16 %v2059, %v2052
    %v2354 = vpack.c.b16 %v2067, %v2060
    %v2355 = vpack.c.b16 %v2068, %v2061
    %v2356 = vpack.c.b16 %v2069, %v2062
    %v2357 = vpack.c.b16 %v2070, %v2063
    %v2358 = vpack.c.b16 %v2071, %v2064
    %v2359 = vpack.c.b16 %v2072, %v2065
    %v2360 = vpack.c.b16 %v2073, %v2066
    %v2361 = vpack.c.b16 %v2081, %v2074
    %v2362 = vpack.c.b16 %v2082, %v2075
    %v2363 = vpack.c.b16 %v2083, %v2076
    %v2364 = vpack.c.b16 %v2084, %v2077
    %v2365 = vpack.c.b16 %v2085, %v2078
    %v2366 = vpack.c.b16 %v2086, %v2079
    %v2367 = vpack.c.b16 %v2087, %v2080
    %v2368 = vpack.c.b16 %v2095, %v2088
    %v2369 = vpack.c.b16 %v2096, %v2089
    %v2370 = vpack.c.b16 %v2097, %v2090
    %v2371 = vpack.c.b16 %v2098, %v2091
    %v2372 = vpack.c.b16 %v2099, %v2092
    %v2373 = vpack.c.b16 %v2100, %v2093
    %v2374 = vpack.c.b16 %v2101, %v2094
    %v2375 = vpack.c.b16 %v2109, %v2102
    %v2376 = vpack.c.b16 %v2110, %v2103
    %v2377 = vpack.c.b16 %v2111, %v2104
    %v2378 = vpack.c.b16 %v2112, %v2105
    %v2379 = vpack.c.b16 %v2113, %v2106
    %v2380 = vpack.c.b16 %v2114, %v2107
    %v2381 = vpack.c.b16 %v2115, %v2108
    %v2382 = vpack.c.b16 %v2123, %v2116
    %v2383 = vpack.c.b16 %v2124, %v2117
    %v2384 = vpack.c.b16 %v2125, %v2118
    %v2385 = vpack.c.b16 %v2126, %v2119
    %v2386 = vpack.c.b16 %v2127, %v2120
    %v2387 = vpack.c.b16 %v2128, %v2121
    %v2388 = vpack.c.b16 %v2129, %v2122
    %v2389 = vpack.c.b16 %v2137, %v2130
    %v2390 = vpack.c.b16 %v2138, %v2131
    %v2391 = vpack.c.b16 %v2139, %v2132
    %v2392 = vpack.c.b16 %v2140, %v2133
    %v2393 = vpack.c.b16 %v2141, %v2134
    %v2394 = vpack.c.b16 %v2142, %v2135
    %v2395 = vpack.c.b16 %v2143, %v2136
    %v2396 = vpack.c.b16 %v2151, %v2144
    %v2397 = vpack.c.b16 %v2152, %v2145
    %v2398 = vpack.c.b16 %v2153, %v2146
    %v2399 = vpack.c.b16 %v2154, %v2147
    %v2400 = vpack.c.b16 %v2155, %v2148
    %v2401 = vpack.c.b16 %v2156, %v2149
    %v2402 = vpack.c.b16 %v2157, %v2150
    %v2403 = vpack.c.b16 %v2165, %v2158
    %v2404 = vpack.c.b16 %v2166, %v2159
    %v2405 = vpack.c.b16 %v2167, %v2160
    %v2406 = vpack.c.b16 %v2168, %v2161
    %v2407 = vpack.c.b16 %v2169, %v2162
    %v2408 = vpack.c.b16 %v2170, %v2163
    %v2409 = vpack.c.b16 %v2171, %v2164
    %v2410 = vpack.c.b16 %v2179, %v2172
    %v2411 = vpack.c.b16 %v2180, %v2173
    %v2412 = vpack.c.b16 %v2181, %v2174
    %v2413 = vpack.c.b16 %v2182, %v2175
    %v2414 = vpack.c.b16 %v2183, %v2176
    %v2415 = vpack.c.b16 %v2184, %v2177
    %v2416 = vpack.c.b16 %v2185, %v2178
    %v2417 = vpack.c.b16 %v2193, %v2186
    %v2418 = vpack.c.b16 %v2194, %v2187
    %v2419 = vpack.c.b16 %v2195, %v2188
    %v2420 = vpack.c.b16 %v2196, %v2189
    %v2421 = vpack.c.b16 %v2197, %v2190
    %v2422 = vpack.c.b16 %v2198, %v2191
    %v2423 = vpack.c.b16 %v2199, %v2192
    %2648 = vmatprep.subr.bf16.mxu0 %v2201
    %2649 = vmatpush1.bf16.msra.mxu0 %v2200
    %2650 = vmatprep.subr.bf16.mxu0 %v2208
    %2651 = vmatpush1.bf16.msra.mxu0 %v2207
    %2652 = vmatprep.subr.bf16.mxu0 %v2215
    %2653 = vmatpush1.bf16.msra.mxu0 %v2214
    %2654 = vmatprep.subr.bf16.mxu0 %v2222
    %2655 = vmatpush1.bf16.msra.mxu0 %v2221
    %2656 = vmatprep.subr.bf16.mxu0 %v2229
    %2657 = vmatpush1.bf16.msra.mxu0 %v2228
    %2658 = vmatprep.subr.bf16.mxu0 %v2236
    %2659 = vmatpush1.bf16.msra.mxu0 %v2235
    %2660 = vmatprep.subr.bf16.mxu0 %v2243
    %2661 = vmatpush1.bf16.msra.mxu0 %v2242
    %2662 = vmatprep.subr.bf16.mxu0 %v2250
    %2663 = vmatpush1.bf16.msra.mxu0 %v2249
    %2664 = vmatprep.subr.bf16.mxu0 %v2257
    %2665 = vmatpush1.bf16.msra.mxu0 %v2256
    %2666 = vmatprep.subr.bf16.mxu0 %v2264
    %2667 = vmatpush1.bf16.msra.mxu0 %v2263
    %2668 = vmatprep.subr.bf16.mxu0 %v2271
    %2669 = vmatpush1.bf16.msra.mxu0 %v2270
    %2670 = vmatprep.subr.bf16.mxu0 %v2278
    %2671 = vmatpush1.bf16.msra.mxu0 %v2277
    %2672 = vmatprep.subr.bf16.mxu0 %v2285
    %2673 = vmatpush1.bf16.msra.mxu0 %v2284
    %2674 = vmatprep.subr.bf16.mxu0 %v2292
    %2675 = vmatpush1.bf16.msra.mxu0 %v2291
    %2676 = vmatprep.subr.bf16.mxu0 %v2299
    %2677 = vmatpush1.bf16.msra.mxu0 %v2298
    %2678 = vmatprep.subr.bf16.mxu0 %v2306
    %2679 = vmatpush1.bf16.msra.mxu0 %v2305
    %2680 = vmatprep.mubr.bf16.mxu0 %v1200
    %2681 = vmatmul.mubr.bf16.gmra.mrb[0].mxu0 %v1199
    %v2682 = vpop.f32.mrb[0].mxu0
    %v2683 = vadd.f32 %v1464, %v2682
    %v2684 = vpop.f32.mrb[0].mxu0
    %v2685 = vadd.f32 %v1468, %v2684
    %v2686 = vpop.f32.mrb[0].mxu0
    %v2687 = vadd.f32 %v1464, %v2686
    %v2688 = vpop.f32.mrb[0].mxu0
    %v2689 = vadd.f32 %v1468, %v2688
    %2690 = vdwg.mxu0
    %2691 = vmatprep.subr.bf16.mxu0 %v2313
    %2692 = vmatpush1.bf16.msra.mxu0 %v2312
    %2693 = vmatprep.subr.bf16.mxu0 %v2320
    %2694 = vmatpush1.bf16.msra.mxu0 %v2319
    %2695 = vmatprep.subr.bf16.mxu0 %v2327
    %2696 = vmatpush1.bf16.msra.mxu0 %v2326
    %2697 = vmatprep.subr.bf16.mxu0 %v2334
    %2698 = vmatpush1.bf16.msra.mxu0 %v2333
    %2699 = vmatprep.subr.bf16.mxu0 %v2341
    %2700 = vmatpush1.bf16.msra.mxu0 %v2340
    %2701 = vmatprep.subr.bf16.mxu0 %v2348
    %2702 = vmatpush1.bf16.msra.mxu0 %v2347
    %2703 = vmatprep.subr.bf16.mxu0 %v2355
    %2704 = vmatpush1.bf16.msra.mxu0 %v2354
    %2705 = vmatprep.subr.bf16.mxu0 %v2362
    %2706 = vmatpush1.bf16.msra.mxu0 %v2361
    %2707 = vmatprep.subr.bf16.mxu0 %v2369
    %2708 = vmatpush1.bf16.msra.mxu0 %v2368
    %2709 = vmatprep.subr.bf16.mxu0 %v2376
    %2710 = vmatpush1.bf16.msra.mxu0 %v2375
    %2711 = vmatprep.subr.bf16.mxu0 %v2383
    %2712 = vmatpush1.bf16.msra.mxu0 %v2382
    %2713 = vmatprep.subr.bf16.mxu0 %v2390
    %2714 = vmatpush1.bf16.msra.mxu0 %v2389
    %2715 = vmatprep.subr.bf16.mxu0 %v2397
    %2716 = vmatpush1.bf16.msra.mxu0 %v2396
    %2717 = vmatprep.subr.bf16.mxu0 %v2404
    %2718 = vmatpush1.bf16.msra.mxu0 %v2403
    %2719 = vmatprep.subr.bf16.mxu0 %v2411
    %2720 = vmatpush1.bf16.msra.mxu0 %v2410
    %2721 = vmatprep.subr.bf16.mxu0 %v2418
    %2722 = vmatpush1.bf16.msra.mxu0 %v2417
    %2723 = vmatprep.mubr.bf16.mxu0 %v1202
    %2724 = vmatmul.mubr.bf16.gmra.mrb[0].mxu0 %v1201
    %v2725 = vpop.f32.mrb[0].mxu0
    %v2726 = vadd.f32 %v2683, %v2725
    %v2727 = vpop.f32.mrb[0].mxu0
    %v2728 = vadd.f32 %v2685, %v2727
    %v2729 = vpop.f32.mrb[0].mxu0
    %v2730 = vadd.f32 %v2687, %v2729
    %v2731 = vpop.f32.mrb[0].mxu0
    %v2732 = vadd.f32 %v2689, %v2731
    %2733 = vdwg.mxu0
    %2734 = vmatprep.subr.bf16.mxu0 %v2203
    %2735 = vmatpush1.bf16.msra.mxu0 %v2202
    %2736 = vmatprep.subr.bf16.mxu0 %v2210
    %2737 = vmatpush1.bf16.msra.mxu0 %v2209
    %2738 = vmatprep.subr.bf16.mxu0 %v2217
    %2739 = vmatpush1.bf16.msra.mxu0 %v2216
    %2740 = vmatprep.subr.bf16.mxu0 %v2224
    %2741 = vmatpush1.bf16.msra.mxu0 %v2223
    %2742 = vmatprep.subr.bf16.mxu0 %v2231
    %2743 = vmatpush1.bf16.msra.mxu0 %v2230
    %2744 = vmatprep.subr.bf16.mxu0 %v2238
    %2745 = vmatpush1.bf16.msra.mxu0 %v2237
    %2746 = vmatprep.subr.bf16.mxu0 %v2245
    %2747 = vmatpush1.bf16.msra.mxu0 %v2244
    %2748 = vmatprep.subr.bf16.mxu0 %v2252
    %2749 = vmatpush1.bf16.msra.mxu0 %v2251
    %2750 = vmatprep.subr.bf16.mxu0 %v2259
    %2751 = vmatpush1.bf16.msra.mxu0 %v2258
    %2752 = vmatprep.subr.bf16.mxu0 %v2266
    %2753 = vmatpush1.bf16.msra.mxu0 %v2265
    %2754 = vmatprep.subr.bf16.mxu0 %v2273
    %2755 = vmatpush1.bf16.msra.mxu0 %v2272
    %2756 = vmatprep.subr.bf16.mxu0 %v2280
    %2757 = vmatpush1.bf16.msra.mxu0 %v2279
    %2758 = vmatprep.subr.bf16.mxu0 %v2287
    %2759 = vmatpush1.bf16.msra.mxu0 %v2286
    %2760 = vmatprep.subr.bf16.mxu0 %v2294
    %2761 = vmatpush1.bf16.msra.mxu0 %v2293
    %2762 = vmatprep.subr.bf16.mxu0 %v2301
    %2763 = vmatpush1.bf16.msra.mxu0 %v2300
    %2764 = vmatprep.subr.bf16.mxu0 %v2308
    %2765 = vmatpush1.bf16.msra.mxu0 %v2307
    %2766 = vmatprep.mubr.bf16.mxu0 %v1200
    %2767 = vmatmul.mubr.bf16.gmra.mrb[0].mxu0 %v1199
    %v2768 = vpop.f32.mrb[0].mxu0
    %v2769 = vadd.f32 %v1472, %v2768
    %v2770 = vpop.f32.mrb[0].mxu0
    %v2771 = vadd.f32 %v1476, %v2770
    %v2772 = vpop.f32.mrb[0].mxu0
    %v2773 = vadd.f32 %v1472, %v2772
    %v2774 = vpop.f32.mrb[0].mxu0
    %v2775 = vadd.f32 %v1476, %v2774
    %2776 = vdwg.mxu0
    %2777 = vmatprep.subr.bf16.mxu0 %v2315
    %2778 = vmatpush1.bf16.msra.mxu0 %v2314
    %2779 = vmatprep.subr.bf16.mxu0 %v2322
    %2780 = vmatpush1.bf16.msra.mxu0 %v2321
    %2781 = vmatprep.subr.bf16.mxu0 %v2329
    %2782 = vmatpush1.bf16.msra.mxu0 %v2328
    %2783 = vmatprep.subr.bf16.mxu0 %v2336
    %2784 = vmatpush1.bf16.msra.mxu0 %v2335
    %2785 = vmatprep.subr.bf16.mxu0 %v2343
    %2786 = vmatpush1.bf16.msra.mxu0 %v2342
    %2787 = vmatprep.subr.bf16.mxu0 %v2350
    %2788 = vmatpush1.bf16.msra.mxu0 %v2349
    %2789 = vmatprep.subr.bf16.mxu0 %v2357
    %2790 = vmatpush1.bf16.msra.mxu0 %v2356
    %2791 = vmatprep.subr.bf16.mxu0 %v2364
    %2792 = vmatpush1.bf16.msra.mxu0 %v2363
    %2793 = vmatprep.subr.bf16.mxu0 %v2371
    %2794 = vmatpush1.bf16.msra.mxu0 %v2370
    %2795 = vmatprep.subr.bf16.mxu0 %v2378
    %2796 = vmatpush1.bf16.msra.mxu0 %v2377
    %2797 = vmatprep.subr.bf16.mxu0 %v2385
    %2798 = vmatpush1.bf16.msra.mxu0 %v2384
    %2799 = vmatprep.subr.bf16.mxu0 %v2392
    %2800 = vmatpush1.bf16.msra.mxu0 %v2391
    %2801 = vmatprep.subr.bf16.mxu0 %v2399
    %2802 = vmatpush1.bf16.msra.mxu0 %v2398
    %2803 = vmatprep.subr.bf16.mxu0 %v2406
    %2804 = vmatpush1.bf16.msra.mxu0 %v2405
    %2805 = vmatprep.subr.bf16.mxu0 %v2413
    %2806 = vmatpush1.bf16.msra.mxu0 %v2412
    %2807 = vmatprep.subr.bf16.mxu0 %v2420
    %2808 = vmatpush1.bf16.msra.mxu0 %v2419
    %2809 = vmatprep.mubr.bf16.mxu0 %v1202
    %2810 = vmatmul.mubr.bf16.gmra.mrb[0].mxu0 %v1201
    %v2811 = vpop.f32.mrb[0].mxu0
    %v2812 = vadd.f32 %v2769, %v2811
    %v2813 = vpop.f32.mrb[0].mxu0
    %v2814 = vadd.f32 %v2771, %v2813
    %v2815 = vpop.f32.mrb[0].mxu0
    %v2816 = vadd.f32 %v2773, %v2815
    %v2817 = vpop.f32.mrb[0].mxu0
    %v2818 = vadd.f32 %v2775, %v2817
    %2819 = vdwg.mxu0
    %2820 = vmatprep.subr.bf16.mxu0 %v2205
    %2821 = vmatpush1.bf16.msra.mxu0 %v2204
    %2822 = vmatprep.subr.bf16.mxu0 %v2212
    %2823 = vmatpush1.bf16.msra.mxu0 %v2211
    %2824 = vmatprep.subr.bf16.mxu0 %v2219
    %2825 = vmatpush1.bf16.msra.mxu0 %v2218
    %2826 = vmatprep.subr.bf16.mxu0 %v2226
    %2827 = vmatpush1.bf16.msra.mxu0 %v2225
    %2828 = vmatprep.subr.bf16.mxu0 %v2233
    %2829 = vmatpush1.bf16.msra.mxu0 %v2232
    %2830 = vmatprep.subr.bf16.mxu0 %v2240
    %2831 = vmatpush1.bf16.msra.mxu0 %v2239
    %2832 = vmatprep.subr.bf16.mxu0 %v2247
    %2833 = vmatpush1.bf16.msra.mxu0 %v2246
    %2834 = vmatprep.subr.bf16.mxu0 %v2254
    %2835 = vmatpush1.bf16.msra.mxu0 %v2253
    %2836 = vmatprep.subr.bf16.mxu0 %v2261
    %2837 = vmatpush1.bf16.msra.mxu0 %v2260
    %2838 = vmatprep.subr.bf16.mxu0 %v2268
    %2839 = vmatpush1.bf16.msra.mxu0 %v2267
    %2840 = vmatprep.subr.bf16.mxu0 %v2275
    %2841 = vmatpush1.bf16.msra.mxu0 %v2274
    %2842 = vmatprep.subr.bf16.mxu0 %v2282
    %2843 = vmatpush1.bf16.msra.mxu0 %v2281
    %2844 = vmatprep.subr.bf16.mxu0 %v2289
    %2845 = vmatpush1.bf16.msra.mxu0 %v2288
    %2846 = vmatprep.subr.bf16.mxu0 %v2296
    %2847 = vmatpush1.bf16.msra.mxu0 %v2295
    %2848 = vmatprep.subr.bf16.mxu0 %v2303
    %2849 = vmatpush1.bf16.msra.mxu0 %v2302
    %2850 = vmatprep.subr.bf16.mxu0 %v2310
    %2851 = vmatpush1.bf16.msra.mxu0 %v2309
    %2852 = vmatprep.mubr.bf16.mxu0 %v1200
    %2853 = vmatmul.mubr.bf16.gmra.mrb[0].mxu0 %v1199
    %v2854 = vpop.f32.mrb[0].mxu0
    %v2855 = vadd.f32 %v1480, %v2854
    %v2856 = vpop.f32.mrb[0].mxu0
    %v2857 = vadd.f32 %v1484, %v2856
    %v2858 = vpop.f32.mrb[0].mxu0
    %v2859 = vadd.f32 %v1480, %v2858
    %v2860 = vpop.f32.mrb[0].mxu0
    %v2861 = vadd.f32 %v1484, %v2860
    %2862 = vdwg.mxu0
    %2863 = vmatprep.subr.bf16.mxu0 %v2317
    %2864 = vmatpush1.bf16.msra.mxu0 %v2316
    %2865 = vmatprep.subr.bf16.mxu0 %v2324
    %2866 = vmatpush1.bf16.msra.mxu0 %v2323
    %2867 = vmatprep.subr.bf16.mxu0 %v2331
    %2868 = vmatpush1.bf16.msra.mxu0 %v2330
    %2869 = vmatprep.subr.bf16.mxu0 %v2338
    %2870 = vmatpush1.bf16.msra.mxu0 %v2337
    %2871 = vmatprep.subr.bf16.mxu0 %v2345
    %2872 = vmatpush1.bf16.msra.mxu0 %v2344
    %2873 = vmatprep.subr.bf16.mxu0 %v2352
    %2874 = vmatpush1.bf16.msra.mxu0 %v2351
    %2875 = vmatprep.subr.bf16.mxu0 %v2359
    %2876 = vmatpush1.bf16.msra.mxu0 %v2358
    %2877 = vmatprep.subr.bf16.mxu0 %v2366
    %2878 = vmatpush1.bf16.msra.mxu0 %v2365
    %2879 = vmatprep.subr.bf16.mxu0 %v2373
    %2880 = vmatpush1.bf16.msra.mxu0 %v2372
    %2881 = vmatprep.subr.bf16.mxu0 %v2380
    %2882 = vmatpush1.bf16.msra.mxu0 %v2379
    %2883 = vmatprep.subr.bf16.mxu0 %v2387
    %2884 = vmatpush1.bf16.msra.mxu0 %v2386
    %2885 = vmatprep.subr.bf16.mxu0 %v2394
    %2886 = vmatpush1.bf16.msra.mxu0 %v2393
    %2887 = vmatprep.subr.bf16.mxu0 %v2401
    %2888 = vmatpush1.bf16.msra.mxu0 %v2400
    %2889 = vmatprep.subr.bf16.mxu0 %v2408
    %2890 = vmatpush1.bf16.msra.mxu0 %v2407
    %2891 = vmatprep.subr.bf16.mxu0 %v2415
    %2892 = vmatpush1.bf16.msra.mxu0 %v2414
    %2893 = vmatprep.subr.bf16.mxu0 %v2422
    %2894 = vmatpush1.bf16.msra.mxu0 %v2421
    %2895 = vmatprep.mubr.bf16.mxu0 %v1202
    %2896 = vmatmul.mubr.bf16.gmra.mrb[0].mxu0 %v1201
    %v2897 = vpop.f32.mrb[0].mxu0
    %v2898 = vadd.f32 %v2855, %v2897
    %v2899 = vpop.f32.mrb[0].mxu0
    %v2900 = vadd.f32 %v2857, %v2899
    %v2901 = vpop.f32.mrb[0].mxu0
    %v2902 = vadd.f32 %v2859, %v2901
    %v2903 = vpop.f32.mrb[0].mxu0
    %v2904 = vadd.f32 %v2861, %v2903
    %2905 = vdwg.mxu0
    %2906 = vmatprep.subr.bf16.mxu0 0
    %2907 = vmatpush1.bf16.msra.mxu0 %v2206
    %2908 = vmatprep.subr.bf16.mxu0 0
    %2909 = vmatpush1.bf16.msra.mxu0 %v2213
    %2910 = vmatprep.subr.bf16.mxu0 0
    %2911 = vmatpush1.bf16.msra.mxu0 %v2220
    %2912 = vmatprep.subr.bf16.mxu0 0
    %2913 = vmatpush1.bf16.msra.mxu0 %v2227
    %2914 = vmatprep.subr.bf16.mxu0 0
    %2915 = vmatpush1.bf16.msra.mxu0 %v2234
    %2916 = vmatprep.subr.bf16.mxu0 0
    %2917 = vmatpush1.bf16.msra.mxu0 %v2241
    %2918 = vmatprep.subr.bf16.mxu0 0
    %2919 = vmatpush1.bf16.msra.mxu0 %v2248
    %2920 = vmatprep.subr.bf16.mxu0 0
    %2921 = vmatpush1.bf16.msra.mxu0 %v2255
    %2922 = vmatprep.subr.bf16.mxu0 0
    %2923 = vmatpush1.bf16.msra.mxu0 %v2262
    %2924 = vmatprep.subr.bf16.mxu0 0
    %2925 = vmatpush1.bf16.msra.mxu0 %v2269
    %2926 = vmatprep.subr.bf16.mxu0 0
    %2927 = vmatpush1.bf16.msra.mxu0 %v2276
    %2928 = vmatprep.subr.bf16.mxu0 0
    %2929 = vmatpush1.bf16.msra.mxu0 %v2283
    %2930 = vmatprep.subr.bf16.mxu0 0
    %2931 = vmatpush1.bf16.msra.mxu0 %v2290
    %2932 = vmatprep.subr.bf16.mxu0 0
    %2933 = vmatpush1.bf16.msra.mxu0 %v2297
    %2934 = vmatprep.subr.bf16.mxu0 0
    %2935 = vmatpush1.bf16.msra.mxu0 %v2304
    %2936 = vmatprep.subr.bf16.mxu0 0
    %2937 = vmatpush1.bf16.msra.mxu0 %v2311
    %2938 = vmatprep.mubr.bf16.mxu0 %v1200
    %2939 = vmatmul.mubr.bf16.gmra.mrb[0].mxu0 %v1199
    %v2940 = vpop.f32.mrb[0].mxu0
    %v2941 = vadd.f32 %v1488, %v2940
    %v2942 = vpop.f32.mrb[0].mxu0
    %v2943 = vpop.f32.mrb[0].mxu0
    %v2944 = vadd.f32 %v1488, %v2943
    %v2945 = vpop.f32.mrb[0].mxu0
    %2946 = vdwg.mxu0
    %2947 = vmatprep.subr.bf16.mxu0 0
    %2948 = vmatpush1.bf16.msra.mxu0 %v2318
    %2949 = vmatprep.subr.bf16.mxu0 0
    %2950 = vmatpush1.bf16.msra.mxu0 %v2325
    %2951 = vmatprep.subr.bf16.mxu0 0
    %2952 = vmatpush1.bf16.msra.mxu0 %v2332
    %2953 = vmatprep.subr.bf16.mxu0 0
    %2954 = vmatpush1.bf16.msra.mxu0 %v2339
    %2955 = vmatprep.subr.bf16.mxu0 0
    %2956 = vmatpush1.bf16.msra.mxu0 %v2346
    %2957 = vmatprep.subr.bf16.mxu0 0
    %2958 = vmatpush1.bf16.msra.mxu0 %v2353
    %2959 = vmatprep.subr.bf16.mxu0 0
    %2960 = vmatpush1.bf16.msra.mxu0 %v2360
    %2961 = vmatprep.subr.bf16.mxu0 0
    %2962 = vmatpush1.bf16.msra.mxu0 %v2367
    %2963 = vmatprep.subr.bf16.mxu0 0
    %2964 = vmatpush1.bf16.msra.mxu0 %v2374
    %2965 = vmatprep.subr.bf16.mxu0 0
    %2966 = vmatpush1.bf16.msra.mxu0 %v2381
    %2967 = vmatprep.subr.bf16.mxu0 0
    %2968 = vmatpush1.bf16.msra.mxu0 %v2388
    %2969 = vmatprep.subr.bf16.mxu0 0
    %2970 = vmatpush1.bf16.msra.mxu0 %v2395
    %2971 = vmatprep.subr.bf16.mxu0 0
    %2972 = vmatpush1.bf16.msra.mxu0 %v2402
    %2973 = vmatprep.subr.bf16.mxu0 0
    %2974 = vmatpush1.bf16.msra.mxu0 %v2409
    %2975 = vmatprep.subr.bf16.mxu0 0
    %2976 = vmatpush1.bf16.msra.mxu0 %v2416
    %2977 = vmatprep.subr.bf16.mxu0 0
    %2978 = vmatpush1.bf16.msra.mxu0 %v2423
    %2979 = vmatprep.mubr.bf16.mxu0 %v1202
    %2980 = vmatmul.mubr.bf16.gmra.mrb[0].mxu0 %v1201
    %v2981 = vpop.f32.mrb[0].mxu0
    %v2982 = vadd.f32 %v2941, %v2981
    %v2983 = vpop.f32.mrb[0].mxu0
    %v2984 = vpop.f32.mrb[0].mxu0
    %v2985 = vadd.f32 %v2944, %v2984
    %v2986 = vpop.f32.mrb[0].mxu0
    %2987 = vdwg.mxu0
    %v2988 = vsub.f32 0.0, %v2726
    %v2989 = vsub.f32 0.0, %v2728
    %v2990 = vsub.f32 0.0, %v2812
    %v2991 = vsub.f32 0.0, %v2814
    %v2992 = vsub.f32 0.0, %v2898
    %v2993 = vsub.f32 0.0, %v2900
    %v2994 = vsub.f32 0.0, %v2982
    %v2995 = vsub.f32 0.0, %v2730
    %v2996 = vsub.f32 0.0, %v2732
    %v2997 = vsub.f32 0.0, %v2816
    %v2998 = vsub.f32 0.0, %v2818
    %v2999 = vsub.f32 0.0, %v2902
    %v3000 = vsub.f32 0.0, %v2904
    %v3001 = vsub.f32 0.0, %v2985
    %v3002 = vmul.f32 %v2988, 1.442695
    %v3003 = vpow.pop %v3002
    %v3004 = vmul.f32 %v2989, 1.442695
    %v3005 = vpow.pop %v3004
    %v3006 = vmul.f32 %v2990, 1.442695
    %v3007 = vpow.pop %v3006
    %v3008 = vmul.f32 %v2991, 1.442695
    %v3009 = vpow.pop %v3008
    %v3010 = vmul.f32 %v2992, 1.442695
    %v3011 = vpow.pop %v3010
    %v3012 = vmul.f32 %v2993, 1.442695
    %v3013 = vpow.pop %v3012
    %v3014 = vmul.f32 %v2994, 1.442695
    %v3015 = vpow.pop %v3014
    %v3016 = vmul.f32 %v2995, 1.442695
    %v3017 = vpow.pop %v3016
    %v3018 = vmul.f32 %v2996, 1.442695
    %v3019 = vpow.pop %v3018
    %v3020 = vmul.f32 %v2997, 1.442695
    %v3021 = vpow.pop %v3020
    %v3022 = vmul.f32 %v2998, 1.442695
    %v3023 = vpow.pop %v3022
    %v3024 = vmul.f32 %v2999, 1.442695
    %v3025 = vpow.pop %v3024
    %v3026 = vmul.f32 %v3000, 1.442695
    %v3027 = vpow.pop %v3026
    %v3028 = vmul.f32 %v3001, 1.442695
    %v3029 = vpow.pop %v3028
    %v3030 = vadd.f32 %v3003, 1.0
    %v3031 = vadd.f32 %v3005, 1.0
    %v3032 = vadd.f32 %v3007, 1.0
    %v3033 = vadd.f32 %v3009, 1.0
    %v3034 = vadd.f32 %v3011, 1.0
    %v3035 = vadd.f32 %v3013, 1.0
    %v3036 = vadd.f32 %v3015, 1.0
    %v3037 = vadd.f32 %v3017, 1.0
    %v3038 = vadd.f32 %v3019, 1.0
    %v3039 = vadd.f32 %v3021, 1.0
    %v3040 = vadd.f32 %v3023, 1.0
    %v3041 = vadd.f32 %v3025, 1.0
    %v3042 = vadd.f32 %v3027, 1.0
    %v3043 = vadd.f32 %v3029, 1.0
    %v3044 = vrcp.pop %v3030
    %v3045 = vrcp.pop %v3031
    %v3046 = vrcp.pop %v3032
    %v3047 = vrcp.pop %v3033
    %v3048 = vrcp.pop %v3034
    %v3049 = vrcp.pop %v3035
    %v3050 = vrcp.pop %v3036
    %v3051 = vrcp.pop %v3037
    %v3052 = vrcp.pop %v3038
    %v3053 = vrcp.pop %v3039
    %v3054 = vrcp.pop %v3040
    %v3055 = vrcp.pop %v3041
    %v3056 = vrcp.pop %v3042
    %v3057 = vrcp.pop %v3043
    %v3058 = vpack.c.bf16 %v3051, %v3044
    %v3059 = vpack.c.bf16 %v3052, %v3045
    %v3060 = vpack.c.bf16 %v3053, %v3046
    %v3061 = vpack.c.bf16 %v3054, %v3047
    %v3062 = vpack.c.bf16 %v3055, %v3048
    %v3063 = vpack.c.bf16 %v3056, %v3049
    %v3064 = vpack.c.bf16 %v3057, %v3050
    %v3072 = vunpack.c.l.b16 %v3058
    %v3073 = vunpack.c.l.b16 %v3059
    %v3074 = vunpack.c.l.b16 %v3060
    %v3075 = vunpack.c.l.b16 %v3061
    %v3076 = vunpack.c.l.b16 %v3062
    %v3077 = vunpack.c.l.b16 %v3063
    %v3078 = vunpack.c.l.b16 %v3064
    %v3079 = vunpack.c.h.b16 %v3058
    %v3080 = vunpack.c.h.b16 %v3059
    %v3081 = vunpack.c.h.b16 %v3060
    %v3082 = vunpack.c.h.b16 %v3061
    %v3083 = vunpack.c.h.b16 %v3062
    %v3084 = vunpack.c.h.b16 %v3063
    %v3085 = vunpack.c.h.b16 %v3064
    %v3086 = vpack.c.b16 %v3073, %v3072
    %v3087 = vpack.c.b16 %v3075, %v3074
    %v3088 = vpack.c.b16 %v3077, %v3076
    %v3089 = vpack.c.b16 %v3078, %v3078
    %v3090 = vpack.c.b16 %v3080, %v3079
    %v3091 = vpack.c.b16 %v3082, %v3081
    %v3092 = vpack.c.b16 %v3084, %v3083
    %v3093 = vpack.c.b16 %v3085, %v3085
    %3102 = vst [vmem:[#allocation2] sm:$0xff] %v3086
    %3103 = vst [vmem:[#allocation2 + $0x8] sm:$0xff] %v3087
    %3104 = vst [vmem:[#allocation2 + $0x10] sm:$0xff] %v3088
    %vm3105 = vcmask 125952
    %3106 = vst.msk [vmem:[#allocation2 + $0x18] sm:$0xf] %vm3105, %v3089
    %3107 = vst [vmem:[#allocation2 + $0x1c] sm:$0xff] %v3090
    %3108 = vst [vmem:[#allocation2 + $0x24] sm:$0xff] %v3091
    %3109 = vst [vmem:[#allocation2 + $0x2c] sm:$0xff] %v3092
    %3110 = vst.msk [vmem:[#allocation2 + $0x34] sm:$0xf] %vm3105, %v3093
    // Predicated region
    $region30: #{tpu_custom_call.1} parent=1 // pred_check
      _
    $region31: #{tpu_custom_call.1} parent=1 // pred_check_branch
      %3112 = sbr.rel (0) target = $region33
    $region32: #{tpu_custom_call.1} parent=1 // pred_region
      %s3114 = ssub.s32 896, 896
      %3115 = vsyncadd [#allocation3], %s3114
      %s3116 = sshll.u32 [#allocation2], 4
      %s3117 = int_to_ptr.vmem [resolvable:$true] %s3116
      %3122 = dma.vmem_to_hbm [thread:$0]  %s3117, 896, %s7, [#allocation3], 448, 448, 28
    $region33: #{tpu_custom_call.1} parent=1 // pred_fallthru
      _
    // Predicated region
    $region34: #{tpu_custom_call.1} parent=1 // pred_check
      _
    $region35: #{tpu_custom_call.1} parent=1 // pred_check_branch
      %3124 = sbr.rel (0) target = $region37
    $region36: #{tpu_custom_call.1} parent=1 // pred_region
      %3125 = dma.done [#allocation3], 896
    $region37: #{tpu_custom_call.1} parent=1 // pred_fallthru
      _
    %3126 = vsyncpa [#allocation3], 1

</llo_original>
